<compile_context>
chip_gen: v7x
topology: tpu7x:2x2x1
jax: 0.10.0
libtpu: 0.0.40
codegen_flags: <defaults>
</compile_context>

<pallas_src>
import jax
import jax.numpy as jnp
from jax.experimental import pallas as pl
from jax.experimental.pallas import tpu as pltpu

FRAME_NUM = 10
EMB_W = 2048
EMB_H = 1
HIDDEN = 256
K_TOTAL = FRAME_NUM * EMB_W * EMB_H      # 20480
TK = 2560                                # bf16 w1 tile: 2560*256*2 B = 1.25 MiB -> 8 K-steps
EPS = 1e-5                               # nn.BatchNorm1d default
NEG_SLOPE = 0.01                         # nn.LeakyReLU default
VMEM_LIMIT = 24 * 1024 * 1024            # < v7x 32 MiB default scoped VMEM (64 MiB phys.)

# Double-buffered bf16 w1 tile + resident x must stay well inside the scoped
# VMEM budget on every generation (v7x is the tightest).
assert 2 * (TK * HIDDEN * 2) + 2 * K_TOTAL * 2 < VMEM_LIMIT // 2


def head_kernel(x_ref, w1_ref, b1_ref, gamma_ref, beta_ref, w2_ref, b2_ref,
                o_ref, acc_ref):
    """Fused fc1 (K-streamed, bf16 MXU, f32 accum) + BN + LeakyReLU + fc2."""
    k = pl.program_id(0)

    @pl.when(k == 0)
    def _():
        acc_ref[...] = jnp.zeros_like(acc_ref)

    # x stays resident in VMEM; slice the (B, TK) chunk for this K step.
    kk = pl.multiple_of(k * TK, TK)
    x_tile = x_ref[:, pl.ds(kk, TK)]                              # (B, TK) bf16
    acc_ref[...] += jnp.dot(x_tile, w1_ref[...],
                            preferred_element_type=jnp.float32)   # (B, HIDDEN) f32

    @pl.when(k == pl.num_programs(0) - 1)
    def _():
        # fc1 bias.
        h = acc_ref[...] + b1_ref[...]                            # (B, HIDDEN)
        # BatchNorm1d, training-mode semantics (batch stats, biased variance).
        mean = jnp.mean(h, axis=0, keepdims=True)
        var = jnp.mean((h - mean) * (h - mean), axis=0, keepdims=True)
        hn = (h - mean) * jax.lax.rsqrt(var + EPS)
        hn = hn * gamma_ref[...] + beta_ref[...]
        # LeakyReLU.
        y = jnp.where(hn > 0, hn, NEG_SLOPE * hn)
        # (Dropout: identity, see TODO above.)
        # fc2 (out_features=1): VPU multiply + lane reduce (== y @ w2).
        out = jnp.sum(y * w2_ref[...], axis=-1, keepdims=True)    # (B, 1)
        o_ref[...] = (out + b2_ref[...]).astype(o_ref.dtype)


def xception_dnn_head(head_in, w1_bf16, b1, gamma, beta, w2, b2):
    """head_in: (B, K_TOTAL) f32; w1_bf16: persistent bf16 fc1 weight.  -> (B, 1) f32."""
    B, K = head_in.shape
    assert K == K_TOTAL and K % TK == 0
    k_steps = K // TK

    # x is ~80 KiB bf16 — the per-call cast is negligible (unlike w1, which is
    # pre-cast once outside the call).
    x_bf16 = head_in.astype(jnp.bfloat16)
    w2_row = w2.reshape(1, HIDDEN)          # fc2 weight as a lane-dense row
    b2_11 = b2.reshape(1, 1)

    cost = pl.CostEstimate(
        flops=2 * B * K_TOTAL * HIDDEN,
        transcendentals=0,
        bytes_accessed=(K_TOTAL * HIDDEN * 2          # w1 bf16 stream
                        + B * K_TOTAL * 2             # x bf16
                        + (3 * HIDDEN + HIDDEN + 1) * 4
                        + B * 4),
    )

    return pl.pallas_call(
        head_kernel,
        out_shape=jax.ShapeDtypeStruct((B, 1), jnp.float32),
        grid_spec=pltpu.PrefetchScalarGridSpec(
            num_scalar_prefetch=0,
            grid=(k_steps,),
            in_specs=[
                # x: full-extent, resident in VMEM across all K steps.
                pl.BlockSpec((B, K_TOTAL), lambda k: (0, 0)),
                # w1: streamed (TK, HIDDEN) bf16 tile per K step.
                pl.BlockSpec((TK, HIDDEN), lambda k: (k, 0)),
                # Small epilogue operands: constant block index -> no re-DMA.
                pl.BlockSpec((1, HIDDEN), lambda k: (0, 0)),   # b1
                pl.BlockSpec((1, HIDDEN), lambda k: (0, 0)),   # gamma
                pl.BlockSpec((1, HIDDEN), lambda k: (0, 0)),   # beta
                pl.BlockSpec((1, HIDDEN), lambda k: (0, 0)),   # w2 row
                pl.BlockSpec((1, 1), lambda k: (0, 0)),        # b2
            ],
            # Output resident across the reduction axis; written on last step.
            out_specs=pl.BlockSpec((B, 1), lambda k: (0, 0)),
            scratch_shapes=[pltpu.VMEM((B, HIDDEN), jnp.float32)],
        ),
        compiler_params=pltpu.CompilerParams(
            dimension_semantics=("arbitrary",),
            vmem_limit_bytes=VMEM_LIMIT,
        ),
        cost_estimate=cost,
    )(x_bf16, w1_bf16, b1, gamma, beta, w2_row, b2_11)


def reference_head(head_in, w1_bf16, b1, gamma, beta, w2, b2):
    # Mirrors the kernel's bf16 streaming of x / fc1-weight (f32 accumulation).
    xb = head_in.astype(jnp.bfloat16).astype(jnp.float32)
    wb = w1_bf16.astype(jnp.float32)
    h = xb @ wb + b1
    mean = jnp.mean(h, axis=0, keepdims=True)
    var = jnp.mean((h - mean) ** 2, axis=0, keepdims=True)
    hn = (h - mean) / jnp.sqrt(var + EPS) * gamma + beta
    y = jnp.where(hn > 0, hn, NEG_SLOPE * hn)
    return y @ w2 + b2


if __name__ == "__main__":
    key = jax.random.PRNGKey(0)
    k_feat, k_w1, k_b1, k_w2, k_b2 = jax.random.split(key, 5)

    B = 2                                    # head batch
    # Stand-in for backbone output: (B * frame_num, 2048) pooled features.
    feats = jax.random.normal(k_feat, (B * FRAME_NUM, EMB_W), dtype=jnp.float32)
    # Net effect of the two torch .view() calls: a row-major reshape.
    head_in = feats.reshape(B, K_TOTAL)

    # Deterministic parameter init (PyTorch-Linear-style uniform bounds).
    bound1 = 1.0 / jnp.sqrt(jnp.float32(K_TOTAL))
    w1 = jax.random.uniform(k_w1, (K_TOTAL, HIDDEN), jnp.float32, -bound1, bound1)
    b1 = jax.random.uniform(k_b1, (1, HIDDEN), jnp.float32, -bound1, bound1)
    gamma = jnp.ones((1, HIDDEN), jnp.float32)       # BatchNorm1d fresh init
    beta = jnp.zeros((1, HIDDEN), jnp.float32)
    bound2 = 1.0 / jnp.sqrt(jnp.float32(HIDDEN))
    w2 = jax.random.uniform(k_w2, (HIDDEN, 1), jnp.float32, -bound2, bound2)
    b2 = jax.random.uniform(k_b2, (1, 1), jnp.float32, -bound2, bound2)

    # Persistent bf16 copy of the fc1 weight, created ONCE at init time so no
    # 20 MiB f32->bf16 convert happens per forward call.
    w1_bf16 = jax.block_until_ready(w1.astype(jnp.bfloat16))

    head_fn = jax.jit(xception_dnn_head)
    out = jax.block_until_ready(
        head_fn(head_in, w1_bf16, b1, gamma, beta, w2, b2))

    ref = reference_head(head_in, w1_bf16, b1, gamma, beta, w2, b2)
    assert out.shape == (B, 1)
    # Tolerance accounts for bf16 streaming of x/w1 (f32 accumulation in-kernel).
    assert jnp.allclose(out, ref, atol=2e-3, rtol=2e-3), (out, ref)
    print("KERNEL_OK")
</pallas_src>

<mosaic_0001>
module attributes {stable_mosaic.version = 11 : i64} {
  func.func @head_kernel(%arg0: i32, %arg1: memref<2x20480xbf16, #tpu.memory_space<vmem>>, %arg2: memref<2560x256xbf16, #tpu.memory_space<vmem>>, %arg3: memref<1x256xf32, #tpu.memory_space<vmem>>, %arg4: memref<1x256xf32, #tpu.memory_space<vmem>>, %arg5: memref<1x256xf32, #tpu.memory_space<vmem>>, %arg6: memref<1x256xf32, #tpu.memory_space<vmem>>, %arg7: memref<1x1xf32, #tpu.memory_space<vmem>>, %arg8: memref<2x1xf32, #tpu.memory_space<vmem>>, %arg9: memref<2x256xf32, #tpu.memory_space<vmem>>) attributes {dimension_semantics = [#tpu.dimension_semantics<arbitrary>], iteration_bounds = array<i64: 8>, scalar_prefetch = 0 : i64, scratch_operands = 1 : i64, tpu.core_type = #tpu.core_type<tc>, window_params = [{pipeline_mode = #tpu.pipeline_mode<synchronous>, transform_indices = @transform_0, window_bounds = array<i64: 2, 20480>}, {transform_indices = @transform_1, window_bounds = array<i64: 2560, 256>}, {pipeline_mode = #tpu.pipeline_mode<synchronous>, transform_indices = @transform_2, window_bounds = array<i64: 1, 256>}, {pipeline_mode = #tpu.pipeline_mode<synchronous>, transform_indices = @transform_3, window_bounds = array<i64: 1, 256>}, {pipeline_mode = #tpu.pipeline_mode<synchronous>, transform_indices = @transform_4, window_bounds = array<i64: 1, 256>}, {pipeline_mode = #tpu.pipeline_mode<synchronous>, transform_indices = @transform_5, window_bounds = array<i64: 1, 256>}, {pipeline_mode = #tpu.pipeline_mode<synchronous>, transform_indices = @transform_6, window_bounds = array<i64: 1, 1>}, {pipeline_mode = #tpu.pipeline_mode<synchronous>, transform_indices = @transform_7, window_bounds = array<i64: 2, 1>}]} {
    %c0_i32 = arith.constant 0 : i32
    %0 = arith.cmpi eq, %arg0, %c0_i32 : i32
    %1 = arith.extui %0 : i1 to i32
    %c0_i32_0 = arith.constant 0 : i32
    %2 = arith.cmpi ne, %1, %c0_i32_0 : i32
    scf.if %2 {
      %cst_8 = arith.constant 0.000000e+00 : f32
      %15 = vector.broadcast %cst_8 : f32 to vector<2x256xf32>
      %c0_9 = arith.constant 0 : index
      %c0_10 = arith.constant 0 : index
      %16 = vector.load %arg9[%c0_9, %c0_10] : memref<2x256xf32, #tpu.memory_space<vmem>>, vector<2x256xf32>
      tpu.vector_store %arg9[%c0_9, %c0_10], %15 {strides = array<i32>} : memref<2x256xf32, #tpu.memory_space<vmem>>, vector<2x256xf32>,
    } else {
    }
    %c2560_i32 = arith.constant 2560 : i32
    %3 = arith.muli %arg0, %c2560_i32 : i32
    %4 = tpu.assume_multiple %3, 2560 : i32
    %c0 = arith.constant 0 : index
    %5 = arith.index_cast %4 : i32 to index
    %6 = vector.load %arg1[%c0, %5] : memref<2x20480xbf16, #tpu.memory_space<vmem>>, vector<2x2560xbf16>
    %c0_1 = arith.constant 0 : index
    %c0_2 = arith.constant 0 : index
    %7 = vector.load %arg9[%c0_1, %c0_2] : memref<2x256xf32, #tpu.memory_space<vmem>>, vector<2x256xf32>
    %c0_3 = arith.constant 0 : index
    %c0_4 = arith.constant 0 : index
    %8 = vector.load %arg2[%c0_3, %c0_4] : memref<2560x256xbf16, #tpu.memory_space<vmem>>, vector<2560x256xbf16>
    %cst = arith.constant dense<0.000000e+00> : vector<2x256xf32>
    %9 = tpu.matmul %6, %8, %cst {dimension_numbers = #tpu.dot_dimension_numbers<[1], [0], [0], [1], [0, 0, 1, 1], [], []>} : vector<2x2560xbf16>, vector<2560x256xbf16>, vector<2x256xf32> -> vector<2x256xf32>
    %10 = arith.addf %7, %9 : vector<2x256xf32>
    %c0_5 = arith.constant 0 : index
    %c0_6 = arith.constant 0 : index
    %11 = vector.load %arg9[%c0_5, %c0_6] : memref<2x256xf32, #tpu.memory_space<vmem>>, vector<2x256xf32>
    tpu.vector_store %arg9[%c0_5, %c0_6], %10 {strides = array<i32>} : memref<2x256xf32, #tpu.memory_space<vmem>>, vector<2x256xf32>,
    %c7_i32 = arith.constant 7 : i32
    %12 = arith.cmpi eq, %arg0, %c7_i32 : i32
    %13 = arith.extui %12 : i1 to i32
    %c0_i32_7 = arith.constant 0 : i32
    %14 = arith.cmpi ne, %13, %c0_i32_7 : i32
    scf.if %14 {
      %c0_8 = arith.constant 0 : index
      %c0_9 = arith.constant 0 : index
      %15 = vector.load %arg9[%c0_8, %c0_9] : memref<2x256xf32, #tpu.memory_space<vmem>>, vector<2x256xf32>
      %c0_10 = arith.constant 0 : index
      %c0_11 = arith.constant 0 : index
      %16 = vector.load %arg3[%c0_10, %c0_11] : memref<1x256xf32, #tpu.memory_space<vmem>>, vector<1x256xf32>
      %17 = vector.broadcast %16 : vector<1x256xf32> to vector<2x256xf32>
      %18 = arith.addf %15, %17 : vector<2x256xf32>
      %cst_12 = arith.constant dense<0.000000e+00> : vector<256xf32>
      %19 = vector.multi_reduction <add>, %18, %cst_12 [0] : vector<2x256xf32> to vector<256xf32>
      %20 = vector.shape_cast %19 : vector<256xf32> to vector<1x256xf32>
      %cst_13 = arith.constant 2.000000e+00 : f32
      %21 = vector.broadcast %cst_13 : f32 to vector<1x256xf32>
      %22 = arith.divf %20, %21 : vector<1x256xf32>
      %23 = vector.broadcast %22 : vector<1x256xf32> to vector<2x256xf32>
      %24 = arith.subf %18, %23 : vector<2x256xf32>
      %25 = vector.broadcast %22 : vector<1x256xf32> to vector<2x256xf32>
      %26 = arith.subf %18, %25 : vector<2x256xf32>
      %27 = arith.mulf %24, %26 : vector<2x256xf32>
      %cst_14 = arith.constant dense<0.000000e+00> : vector<256xf32>
      %28 = vector.multi_reduction <add>, %27, %cst_14 [0] : vector<2x256xf32> to vector<256xf32>
      %29 = vector.shape_cast %28 : vector<256xf32> to vector<1x256xf32>
      %cst_15 = arith.constant 2.000000e+00 : f32
      %30 = vector.broadcast %cst_15 : f32 to vector<1x256xf32>
      %31 = arith.divf %29, %30 : vector<1x256xf32>
      %32 = vector.broadcast %22 : vector<1x256xf32> to vector<2x256xf32>
      %33 = arith.subf %18, %32 : vector<2x256xf32>
      %cst_16 = arith.constant 9.99999974E-6 : f32
      %34 = vector.broadcast %cst_16 : f32 to vector<1x256xf32>
      %35 = arith.addf %31, %34 : vector<1x256xf32>
      %36 = math.rsqrt %35 : vector<1x256xf32>
      %37 = vector.broadcast %36 : vector<1x256xf32> to vector<2x256xf32>
      %38 = arith.mulf %33, %37 : vector<2x256xf32>
      %c0_17 = arith.constant 0 : index
      %c0_18 = arith.constant 0 : index
      %39 = vector.load %arg4[%c0_17, %c0_18] : memref<1x256xf32, #tpu.memory_space<vmem>>, vector<1x256xf32>
      %40 = vector.broadcast %39 : vector<1x256xf32> to vector<2x256xf32>
      %41 = arith.mulf %38, %40 : vector<2x256xf32>
      %c0_19 = arith.constant 0 : index
      %c0_20 = arith.constant 0 : index
      %42 = vector.load %arg5[%c0_19, %c0_20] : memref<1x256xf32, #tpu.memory_space<vmem>>, vector<1x256xf32>
      %43 = vector.broadcast %42 : vector<1x256xf32> to vector<2x256xf32>
      %44 = arith.addf %41, %43 : vector<2x256xf32>
      %cst_21 = arith.constant 0.000000e+00 : f32
      %45 = vector.broadcast %cst_21 : f32 to vector<2x256xf32>
      %46 = arith.cmpf ogt, %44, %45 : vector<2x256xf32>
      %cst_22 = arith.constant 0.00999999977 : f32
      %47 = vector.broadcast %cst_22 : f32 to vector<2x256xf32>
      %48 = arith.mulf %47, %44 : vector<2x256xf32>
      %49 = arith.select %46, %44, %48 : vector<2x256xi1>, vector<2x256xf32>
      %c0_23 = arith.constant 0 : index
      %c0_24 = arith.constant 0 : index
      %50 = vector.load %arg6[%c0_23, %c0_24] : memref<1x256xf32, #tpu.memory_space<vmem>>, vector<1x256xf32>
      %51 = vector.broadcast %50 : vector<1x256xf32> to vector<2x256xf32>
      %52 = arith.mulf %49, %51 : vector<2x256xf32>
      %cst_25 = arith.constant dense<0.000000e+00> : vector<2xf32>
      %53 = vector.multi_reduction <add>, %52, %cst_25 [1] : vector<2x256xf32> to vector<2xf32>
      %54 = vector.shape_cast %53 : vector<2xf32> to vector<2x1xf32>
      %c0_26 = arith.constant 0 : index
      %c0_27 = arith.constant 0 : index
      %55 = vector.load %arg7[%c0_26, %c0_27] : memref<1x1xf32, #tpu.memory_space<vmem>>, vector<1x1xf32>
      %56 = vector.broadcast %55 : vector<1x1xf32> to vector<2x1xf32>
      %57 = arith.addf %54, %56 : vector<2x1xf32>
      %c0_28 = arith.constant 0 : index
      %c0_29 = arith.constant 0 : index
      %58 = vector.load %arg8[%c0_28, %c0_29] : memref<2x1xf32, #tpu.memory_space<vmem>>, vector<2x1xf32>
      tpu.vector_store %arg8[%c0_28, %c0_29], %57 {strides = array<i32>} : memref<2x1xf32, #tpu.memory_space<vmem>>, vector<2x1xf32>,
    } else {
    }
    return
  }
  func.func @transform_0(%arg0: i32) -> (i32, i32) {
    %c0_i32 = arith.constant 0 : i32
    %c0_i32_0 = arith.constant 0 : i32
    %c0_i32_1 = arith.constant 0 : i32
    return %c0_i32, %c0_i32_0 : i32, i32
  }
  func.func @transform_1(%arg0: i32) -> (i32, i32) {
    %c0_i32 = arith.constant 0 : i32
    %c0_i32_0 = arith.constant 0 : i32
    return %arg0, %c0_i32 : i32, i32
  }
  func.func @transform_2(%arg0: i32) -> (i32, i32) {
    %c0_i32 = arith.constant 0 : i32
    %c0_i32_0 = arith.constant 0 : i32
    %c0_i32_1 = arith.constant 0 : i32
    return %c0_i32, %c0_i32_0 : i32, i32
  }
  func.func @transform_3(%arg0: i32) -> (i32, i32) {
    %c0_i32 = arith.constant 0 : i32
    %c0_i32_0 = arith.constant 0 : i32
    %c0_i32_1 = arith.constant 0 : i32
    return %c0_i32, %c0_i32_0 : i32, i32
  }
  func.func @transform_4(%arg0: i32) -> (i32, i32) {
    %c0_i32 = arith.constant 0 : i32
    %c0_i32_0 = arith.constant 0 : i32
    %c0_i32_1 = arith.constant 0 : i32
    return %c0_i32, %c0_i32_0 : i32, i32
  }
  func.func @transform_5(%arg0: i32) -> (i32, i32) {
    %c0_i32 = arith.constant 0 : i32
    %c0_i32_0 = arith.constant 0 : i32
    %c0_i32_1 = arith.constant 0 : i32
    return %c0_i32, %c0_i32_0 : i32, i32
  }
  func.func @transform_6(%arg0: i32) -> (i32, i32) {
    %c0_i32 = arith.constant 0 : i32
    %c0_i32_0 = arith.constant 0 : i32
    %c0_i32_1 = arith.constant 0 : i32
    return %c0_i32, %c0_i32_0 : i32, i32
  }
  func.func @transform_7(%arg0: i32) -> (i32, i32) {
    %c0_i32 = arith.constant 0 : i32
    %c0_i32_0 = arith.constant 0 : i32
    %c0_i32_1 = arith.constant 0 : i32
    return %c0_i32, %c0_i32_0 : i32, i32
  }
}

</mosaic_0001>

<llo_original>
// kernel: xception_dnn_head.1
$region0: #{xception_dnn_head.1}
  #allocation0 [shape = 'u32[]', space=smem, size = 0x4, offset = 0x4, fixed_abs, tag = 'smem constant byte address 0x4 - core index']
  #allocation1 [shape = 'u32[144,128]{1,0:T(1,128)}', space=vmem, size = 0x12000, scoped, tag = 'internal scratch']
  #allocation2 [shape = 'f32[2,256]{1,0:T(2,128)}', space=vmem, size = 0x800, scoped, tag = 'scratch operand']
  #allocation3 [shape = 'f32[1,1]{1,0:T(1,128)S(1)}', space=vmem, size = 0x200, scoped, tag = 'scoped memory for xception_dnn_head.1']
  %s0 = inlined_call_operand.vmem [shape: bf16[2,20480], index: 0, kind: input, shape index: {}]
  %s1 = inlined_call_operand.hbm [shape: bf16[20480,256], index: 1, kind: input, shape index: {}]
  %s2 = inlined_call_operand.hbm [shape: f32[1,256], index: 2, kind: input, shape index: {}]
  %s3 = inlined_call_operand.hbm [shape: f32[1,256], index: 3, kind: input, shape index: {}]
  %s4 = inlined_call_operand.hbm [shape: f32[1,256], index: 4, kind: input, shape index: {}]
  %s5 = inlined_call_operand.hbm [shape: f32[1,256], index: 5, kind: input, shape index: {}]
  %s6 = inlined_call_operand.<no memory space> [shape: f32[1,1], index: 6, kind: input, shape index: {}]
  %s7 = inlined_call_operand.vmem [shape: f32[2,1], index: 7, kind: output, shape index: {}]
  %s8 = sld [smem:[#allocation0]]
  $region89: #{xception_dnn_head.1} parent=0
    _
  %s10 = ssub.s32 1, %s8
  %s11 = scalar_select 0, %s10, %s8
  %v12 = vstv %s6
  %13 = vst [vmem:[#allocation3] sm:$0x1] %v12
  $region1: #{xception_dnn_head.1} parent=0
    #allocation4 [shape = 'u8[2621440]{0}', space=vmem, size = 0x280000, scoped, tag = 'input window, operand 1']
    #allocation5 [shape = 's32[2]{0}', space=sflag, size = 0x8, scoped, tag = 'scoped memory for xception_dnn_head.1']
    #allocation6 [shape = 'u8[1024]{0}', space=vmem, size = 0x400, scoped, tag = 'input window, operand 2, single buffered']
    #allocation7 [shape = 's32[1]{0}', space=sflag, size = 0x4, scoped, tag = 'scoped memory for xception_dnn_head.1']
    #allocation8 [shape = 'u8[1024]{0}', space=vmem, size = 0x400, scoped, tag = 'input window, operand 3, single buffered']
    #allocation9 [shape = 'u8[1024]{0}', space=vmem, size = 0x400, scoped, tag = 'input window, operand 4, single buffered']
    #allocation10 [shape = 's32[1]{0}', space=sflag, size = 0x4, scoped, tag = 'scoped memory for xception_dnn_head.1']
    #allocation11 [shape = 'u8[1024]{0}', space=vmem, size = 0x400, scoped, tag = 'input window, operand 5, single buffered']
    %14 = vsyncpa [#allocation5], 0
    %s15 = scalar_lea.sflag [#allocation5], 1
    %16 = vsyncpa %s15, 0
    %17 = vsyncpa [#allocation7], 0
    %18 = vsyncpa [#allocation10], 0
    loop: start=0, step=1, limit=10
    $region2: #{xception_dnn_head.1} parent=1 // loop_pre_header
      _
    $region3: #{xception_dnn_head.1} parent=1 // loop_header
      %s20 = sphi 0, %s24
      %p21 = scmp.ge.s32.totalorder %s20, 10
      %s28 = sphi 0, %s28
      %s30 = sphi 0, %s28
      %s31 = sphi 0, %s30
      %s45 = sphi 0, %s31
      %s51 = sphi 0, %s53
      %s54 = sphi 0, %s51
      %s55 = sphi 0, %s54
      %s71 = sphi 0, %s55
      %s75 = sphi 0, %s75
      %s77 = sphi 0, %s75
      %s78 = sphi 0, %s77
      %s92 = sphi 0, %s78
      %s96 = sphi 0, %s96
      %s98 = sphi 0, %s96
      %s99 = sphi 0, %s98
      %s113 = sphi 0, %s99
      %s117 = sphi 0, %s117
      %s119 = sphi 0, %s117
      %s120 = sphi 0, %s119
      %s134 = sphi 0, %s120
      %s138 = sphi 0, %s138
      %s140 = sphi 0, %s138
      %s141 = sphi 0, %s140
      %s155 = sphi 0, %s141
      %s159 = sphi 0, %s159
      %s161 = sphi 0, %s159
      %s162 = sphi 0, %s161
      %s176 = sphi 0, %s162
      %s180 = sphi 0, %s180
      %s182 = sphi 0, %s180
      %s183 = sphi 0, %s182
      %s197 = sphi 0, %s183
    $region4: #{xception_dnn_head.1} parent=1 // loop_header_branch
      %23 = sbr.rel (%p21) target = $region8
    $region5: #{xception_dnn_head.1} parent=1 // loop_body
      %s25 = ssub.s32 %s20, 1
      %s26 = ssub.s32 %s20, 2
      %s27 = sadd.s32 %s20, 1
      %s29 = sadd.s32 %s28, 1
      %p32 = scmp.eq.s32.totalorder %s20, 7
      %p33 = scmp.ne.s32.totalorder %s28, %s30
      %p34 = scmp.eq.s32.totalorder %s20, 0
      %p35 = por %p33, %p34
      %p36 = scmp.ne.s32.totalorder %s28, %s30
      %p37 = scmp.eq.s32.totalorder %s25, 7
      %p38 = por %p36, %p37
      %p39 = scmp.ne.s32.totalorder %s30, %s31
      %p40 = scmp.eq.s32.totalorder %s25, 0
      %p41 = por %p39, %p40
      %p42 = scmp.ne.s32.totalorder %s30, %s31
      %p43 = scmp.eq.s32.totalorder %s26, 7
      %p44 = por %p42, %p43
      %p46 = scmp.ne.s32.totalorder %s31, %s45
      %p47 = scmp.eq.s32.totalorder %s26, 0
      %p48 = por %p46, %p47
      %s49 = ssub.s32 %s20, %s27
      %p50 = scmp.eq.s32.totalorder %s49, 0
      %s52 = sadd.s32 %s51, 1
      %s53 = scalar_select %p50, %s51, %s52
      %p56 = pneg %p50
      %p57 = scmp.eq.s32.totalorder %s20, 7
      %p58 = por %p56, %p57
      %p59 = scmp.ne.s32.totalorder %s51, %s54
      %p60 = scmp.eq.s32.totalorder %s20, 0
      %p61 = por %p59, %p60
      %p62 = scmp.ne.s32.totalorder %s51, %s54
      %p63 = scmp.eq.s32.totalorder %s25, 7
      %p64 = por %p62, %p63
      %p65 = scmp.ne.s32.totalorder %s54, %s55
      %p66 = scmp.eq.s32.totalorder %s25, 0
      %p67 = por %p65, %p66
      %p68 = scmp.ne.s32.totalorder %s54, %s55
      %p69 = scmp.eq.s32.totalorder %s26, 7
      %p70 = por %p68, %p69
      %p72 = scmp.ne.s32.totalorder %s55, %s71
      %p73 = scmp.eq.s32.totalorder %s26, 0
      %p74 = por %p72, %p73
      %s76 = sadd.s32 %s75, 1
      %p79 = scmp.eq.s32.totalorder %s20, 7
      %p80 = scmp.ne.s32.totalorder %s75, %s77
      %p81 = scmp.eq.s32.totalorder %s20, 0
      %p82 = por %p80, %p81
      %p83 = scmp.ne.s32.totalorder %s75, %s77
      %p84 = scmp.eq.s32.totalorder %s25, 7
      %p85 = por %p83, %p84
      %p86 = scmp.ne.s32.totalorder %s77, %s78
      %p87 = scmp.eq.s32.totalorder %s25, 0
      %p88 = por %p86, %p87
      %p89 = scmp.ne.s32.totalorder %s77, %s78
      %p90 = scmp.eq.s32.totalorder %s26, 7
      %p91 = por %p89, %p90
      %p93 = scmp.ne.s32.totalorder %s78, %s92
      %p94 = scmp.eq.s32.totalorder %s26, 0
      %p95 = por %p93, %p94
      %s97 = sadd.s32 %s96, 1
      %p100 = scmp.eq.s32.totalorder %s20, 7
      %p101 = scmp.ne.s32.totalorder %s96, %s98
      %p102 = scmp.eq.s32.totalorder %s20, 0
      %p103 = por %p101, %p102
      %p104 = scmp.ne.s32.totalorder %s96, %s98
      %p105 = scmp.eq.s32.totalorder %s25, 7
      %p106 = por %p104, %p105
      %p107 = scmp.ne.s32.totalorder %s98, %s99
      %p108 = scmp.eq.s32.totalorder %s25, 0
      %p109 = por %p107, %p108
      %p110 = scmp.ne.s32.totalorder %s98, %s99
      %p111 = scmp.eq.s32.totalorder %s26, 7
      %p112 = por %p110, %p111
      %p114 = scmp.ne.s32.totalorder %s99, %s113
      %p115 = scmp.eq.s32.totalorder %s26, 0
      %p116 = por %p114, %p115
      %s118 = sadd.s32 %s117, 1
      %p121 = scmp.eq.s32.totalorder %s20, 7
      %p122 = scmp.ne.s32.totalorder %s117, %s119
      %p123 = scmp.eq.s32.totalorder %s20, 0
      %p124 = por %p122, %p123
      %p125 = scmp.ne.s32.totalorder %s117, %s119
      %p126 = scmp.eq.s32.totalorder %s25, 7
      %p127 = por %p125, %p126
      %p128 = scmp.ne.s32.totalorder %s119, %s120
      %p129 = scmp.eq.s32.totalorder %s25, 0
      %p130 = por %p128, %p129
      %p131 = scmp.ne.s32.totalorder %s119, %s120
      %p132 = scmp.eq.s32.totalorder %s26, 7
      %p133 = por %p131, %p132
      %p135 = scmp.ne.s32.totalorder %s120, %s134
      %p136 = scmp.eq.s32.totalorder %s26, 0
      %p137 = por %p135, %p136
      %s139 = sadd.s32 %s138, 1
      %p142 = scmp.eq.s32.totalorder %s20, 7
      %p143 = scmp.ne.s32.totalorder %s138, %s140
      %p144 = scmp.eq.s32.totalorder %s20, 0
      %p145 = por %p143, %p144
      %p146 = scmp.ne.s32.totalorder %s138, %s140
      %p147 = scmp.eq.s32.totalorder %s25, 7
      %p148 = por %p146, %p147
      %p149 = scmp.ne.s32.totalorder %s140, %s141
      %p150 = scmp.eq.s32.totalorder %s25, 0
      %p151 = por %p149, %p150
      %p152 = scmp.ne.s32.totalorder %s140, %s141
      %p153 = scmp.eq.s32.totalorder %s26, 7
      %p154 = por %p152, %p153
      %p156 = scmp.ne.s32.totalorder %s141, %s155
      %p157 = scmp.eq.s32.totalorder %s26, 0
      %p158 = por %p156, %p157
      %s160 = sadd.s32 %s159, 1
      %p163 = scmp.eq.s32.totalorder %s20, 7
      %p164 = scmp.ne.s32.totalorder %s159, %s161
      %p165 = scmp.eq.s32.totalorder %s20, 0
      %p166 = por %p164, %p165
      %p167 = scmp.ne.s32.totalorder %s159, %s161
      %p168 = scmp.eq.s32.totalorder %s25, 7
      %p169 = por %p167, %p168
      %p170 = scmp.ne.s32.totalorder %s161, %s162
      %p171 = scmp.eq.s32.totalorder %s25, 0
      %p172 = por %p170, %p171
      %p173 = scmp.ne.s32.totalorder %s161, %s162
      %p174 = scmp.eq.s32.totalorder %s26, 7
      %p175 = por %p173, %p174
      %p177 = scmp.ne.s32.totalorder %s162, %s176
      %p178 = scmp.eq.s32.totalorder %s26, 0
      %p179 = por %p177, %p178
      %s181 = sadd.s32 %s180, 1
      %p184 = scmp.eq.s32.totalorder %s20, 7
      %p185 = scmp.ne.s32.totalorder %s180, %s182
      %p186 = scmp.eq.s32.totalorder %s20, 0
      %p187 = por %p185, %p186
      %p188 = scmp.ne.s32.totalorder %s180, %s182
      %p189 = scmp.eq.s32.totalorder %s25, 7
      %p190 = por %p188, %p189
      %p191 = scmp.ne.s32.totalorder %s182, %s183
      %p192 = scmp.eq.s32.totalorder %s25, 0
      %p193 = por %p191, %p192
      %p194 = scmp.ne.s32.totalorder %s182, %s183
      %p195 = scmp.eq.s32.totalorder %s26, 7
      %p196 = por %p194, %p195
      %p198 = scmp.ne.s32.totalorder %s183, %s197
      %p199 = scmp.eq.s32.totalorder %s26, 0
      %p200 = por %p198, %p199
      %p201 = scmp.le.s32.totalorder 1, %s20
      %p202 = scmp.lt.s32.totalorder %s20, 9
      %p203 = pnand %p201, %p202
      %p204 = pneg %p203
      // Predicated region
      $region9: #{xception_dnn_head.1} parent=5 // pred_check
        _
      $region10: #{xception_dnn_head.1} parent=5 // pred_check_branch
        %206 = sbr.rel (%p203) target = $region12
      $region11: #{xception_dnn_head.1} parent=5 // pred_region
        %s207 = ssub.s32 %s20, 1
        // Predicated region
        $region13: #{xception_dnn_head.1} parent=11 // pred_check
          %p208 = pneg %p41
        $region14: #{xception_dnn_head.1} parent=11 // pred_check_branch
          %210 = sbr.rel (%p208) target = $region16
        $region15: #{xception_dnn_head.1} parent=11 // pred_region
          _
        $region16: #{xception_dnn_head.1} parent=11 // pred_fallthru
          _
        // Predicated region
        $region17: #{xception_dnn_head.1} parent=11 // pred_check
          %p211 = pneg %p88
        $region18: #{xception_dnn_head.1} parent=11 // pred_check_branch
          %213 = sbr.rel (%p211) target = $region20
        $region19: #{xception_dnn_head.1} parent=11 // pred_region
          %s215 = ssub.s32 32, 32
          %216 = vsyncadd [#allocation7], %s215
          %s218 = sshll.u32 [#allocation6], 4
          %s219 = int_to_ptr.vmem [resolvable:$true] %s218
          %221 = dma.hbm_to_vmem [thread:$0]  %s2, 32, %s219, [#allocation7]
        $region20: #{xception_dnn_head.1} parent=11 // pred_fallthru
          _
        // Predicated region
        $region21: #{xception_dnn_head.1} parent=11 // pred_check
          %p222 = pneg %p109
        $region22: #{xception_dnn_head.1} parent=11 // pred_check_branch
          %224 = sbr.rel (%p222) target = $region24
        $region23: #{xception_dnn_head.1} parent=11 // pred_region
          %s226 = ssub.s32 32, 32
          %227 = vsyncadd [#allocation7], %s226
          %s229 = sshll.u32 [#allocation8], 4
          %s230 = int_to_ptr.vmem [resolvable:$true] %s229
          %232 = dma.hbm_to_vmem [thread:$0]  %s3, 32, %s230, [#allocation7]
        $region24: #{xception_dnn_head.1} parent=11 // pred_fallthru
          _
        // Predicated region
        $region25: #{xception_dnn_head.1} parent=11 // pred_check
          %p233 = pneg %p130
        $region26: #{xception_dnn_head.1} parent=11 // pred_check_branch
          %235 = sbr.rel (%p233) target = $region28
        $region27: #{xception_dnn_head.1} parent=11 // pred_region
          %s237 = ssub.s32 32, 32
          %238 = vsyncadd [#allocation10], %s237
          %s240 = sshll.u32 [#allocation9], 4
          %s241 = int_to_ptr.vmem [resolvable:$true] %s240
          %243 = dma.hbm_to_vmem [thread:$0]  %s4, 32, %s241, [#allocation10]
        $region28: #{xception_dnn_head.1} parent=11 // pred_fallthru
          _
        // Predicated region
        $region29: #{xception_dnn_head.1} parent=11 // pred_check
          %p244 = pneg %p151
        $region30: #{xception_dnn_head.1} parent=11 // pred_check_branch
          %246 = sbr.rel (%p244) target = $region32
        $region31: #{xception_dnn_head.1} parent=11 // pred_region
          %s248 = ssub.s32 32, 32
          %249 = vsyncadd [#allocation10], %s248
          %s251 = sshll.u32 [#allocation11], 4
          %s252 = int_to_ptr.vmem [resolvable:$true] %s251
          %254 = dma.hbm_to_vmem [thread:$0]  %s5, 32, %s252, [#allocation10]
        $region32: #{xception_dnn_head.1} parent=11 // pred_fallthru
          _
        // Predicated region
        $region33: #{xception_dnn_head.1} parent=11 // pred_check
          %p255 = pneg %p172
        $region34: #{xception_dnn_head.1} parent=11 // pred_check_branch
          %257 = sbr.rel (%p255) target = $region36
        $region35: #{xception_dnn_head.1} parent=11 // pred_region
          _
        $region36: #{xception_dnn_head.1} parent=11 // pred_fallthru
          _
      $region12: #{xception_dnn_head.1} parent=5 // pred_fallthru
        _
      %p258 = scmp.lt.s32.totalorder %s20, 8
      // Predicated region
      $region37: #{xception_dnn_head.1} parent=5 // pred_check
        %p259 = pneg %p258
      $region38: #{xception_dnn_head.1} parent=5 // pred_check_branch
        %261 = sbr.rel (%p259) target = $region40
      $region39: #{xception_dnn_head.1} parent=5 // pred_region
        // Predicated region
        $region41: #{xception_dnn_head.1} parent=39 // pred_check
          %p262 = pneg %p61
        $region42: #{xception_dnn_head.1} parent=39 // pred_check_branch
          %264 = sbr.rel (%p262) target = $region44
        $region43: #{xception_dnn_head.1} parent=39 // pred_region
          %s265 = sand.u32 %s51, 1
          %s266 = scalar_lea.sflag [#allocation5], %s265
          %s267 = sand.u32 %s51, 1
          %s268 = smul.addr %s267, 2560
          %s269 = scalar_lea.vmem [#allocation4], %s268
          %s270 = smul.u32 320, %s20
          %s272 = ssub.s32 40960, 40960
          %273 = vsyncadd %s266, %s272
          %s274 = smul.addr %s270, 2
          %s275 = smul.addr %s274, 64
          %s276 = scalar_lea.hbm %s1, %s275
          %s277 = sshll.u32 %s269, 4
          %s278 = int_to_ptr.vmem [resolvable:$true] %s277
          %283 = dma.hbm_to_vmem [thread:$0]  %s276, 40960, %s278, %s266, 128, 128, 8
        $region44: #{xception_dnn_head.1} parent=39 // pred_fallthru
          _
      $region40: #{xception_dnn_head.1} parent=5 // pred_fallthru
        _
      %p284 = scmp.le.s32.totalorder 1, %s20
      %p285 = scmp.lt.s32.totalorder %s20, 9
      %p286 = pnand %p284, %p285
      %p287 = pneg %p286
      // Predicated region
      $region45: #{xception_dnn_head.1} parent=5 // pred_check
        _
      $region46: #{xception_dnn_head.1} parent=5 // pred_check_branch
        %289 = sbr.rel (%p286) target = $region48
      $region47: #{xception_dnn_head.1} parent=5 // pred_region
        %s290 = ssub.s32 %s20, 1
        %s291 = sand.u32 %s54, 1
        %s292 = scalar_lea.sflag [#allocation5], %s291
        %s293 = sand.u32 %s54, 1
        %s294 = smul.addr %s293, 2560
        %s295 = scalar_lea.vmem [#allocation4], %s294
        // Predicated region
        $region49: #{xception_dnn_head.1} parent=47 // pred_check
          %p296 = pneg %p67
        $region50: #{xception_dnn_head.1} parent=47 // pred_check_branch
          %298 = sbr.rel (%p296) target = $region52
        $region51: #{xception_dnn_head.1} parent=47 // pred_region
          %299 = dma.done %s292, 40960
        $region52: #{xception_dnn_head.1} parent=47 // pred_fallthru
          _
        // Predicated region
        $region53: #{xception_dnn_head.1} parent=47 // pred_check
          %p300 = pneg %p88
        $region54: #{xception_dnn_head.1} parent=47 // pred_check_branch
          %302 = sbr.rel (%p300) target = $region56
        $region55: #{xception_dnn_head.1} parent=47 // pred_region
          %303 = dma.done [#allocation7], 32
        $region56: #{xception_dnn_head.1} parent=47 // pred_fallthru
          _
        // Predicated region
        $region57: #{xception_dnn_head.1} parent=47 // pred_check
          %p304 = pneg %p109
        $region58: #{xception_dnn_head.1} parent=47 // pred_check_branch
          %306 = sbr.rel (%p304) target = $region60
        $region59: #{xception_dnn_head.1} parent=47 // pred_region
          %307 = dma.done [#allocation7], 32
        $region60: #{xception_dnn_head.1} parent=47 // pred_fallthru
          _
        // Predicated region
        $region61: #{xception_dnn_head.1} parent=47 // pred_check
          %p308 = pneg %p130
        $region62: #{xception_dnn_head.1} parent=47 // pred_check_branch
          %310 = sbr.rel (%p308) target = $region64
        $region63: #{xception_dnn_head.1} parent=47 // pred_region
          %311 = dma.done [#allocation10], 32
        $region64: #{xception_dnn_head.1} parent=47 // pred_fallthru
          _
        // Predicated region
        $region65: #{xception_dnn_head.1} parent=47 // pred_check
          %p312 = pneg %p151
        $region66: #{xception_dnn_head.1} parent=47 // pred_check_branch
          %314 = sbr.rel (%p312) target = $region68
        $region67: #{xception_dnn_head.1} parent=47 // pred_region
          %315 = dma.done [#allocation10], 32
        $region68: #{xception_dnn_head.1} parent=47 // pred_fallthru
          _
        %p316 = pneg %p41
        %p317 = pneg %p38
        %s318 = sand.u32 %s54, 1
        %s319 = scalar_lea.sflag [#allocation5], %s318
        %s320 = sand.u32 %s54, 1
        %s321 = smul.addr %s320, 2560
        %s322 = scalar_lea.vmem [#allocation4], %s321
        %p323 = pneg %p67
        %p324 = pneg %p64
        %p325 = pneg %p88
        %p326 = pneg %p85
        %p327 = pneg %p109
        %p328 = pneg %p106
        %p329 = pneg %p130
        %p330 = pneg %p127
        %p331 = pneg %p151
        %p332 = pneg %p148
        %p333 = pneg %p172
        %p334 = pneg %p169
        %p335 = pneg %p193
        %p336 = pneg %p190
        %s337 = smul.u32 320, %s25
        %p338 = scmp.eq.s32.totalorder %s25, 0
        // Predicated region
        $region69: #{xception_dnn_head.1} parent=47 // pred_check
          %p339 = pneg %p338
        $region70: #{xception_dnn_head.1} parent=47 // pred_check_branch
          %341 = sbr.rel (%p339) target = $region72
        $region71: #{xception_dnn_head.1} parent=47 // pred_region
          %342 = vst [vmem:[#allocation2] sm:$0xf] 0.0
        $region72: #{xception_dnn_head.1} parent=47 // pred_fallthru
          _
        %s343 = smul.u32 %s25, 2560
        %s344 = sshra.s32 %s343, 7
        %s345 = sand.u32 %s343, 127
        %s346 = scalar_lea.vmem %s0, %s344
        %v347 = vld [vmem:[%s346] sm:$0xff]
        %v348 = vld [vmem:[%s346 + $0x8] sm:$0xff]
        %v349 = vld [vmem:[%s346 + $0x10] sm:$0xf]
        %v350 = vld [vmem:[#allocation2] sm:$0xf]
        %v351 = vld [vmem:[%s295] sm:$0xff]
        %v352 = vld [vmem:[%s295 + $0x8] sm:$0xff]
        %v353 = vld [vmem:[%s295 + $0x10] sm:$0xff]
        %v354 = vld [vmem:[%s295 + $0x18] sm:$0xff]
        %v355 = vld [vmem:[%s295 + $0x20] sm:$0xff]
        %v356 = vld [vmem:[%s295 + $0x28] sm:$0xff]
        %v357 = vld [vmem:[%s295 + $0x30] sm:$0xff]
        %v358 = vld [vmem:[%s295 + $0x38] sm:$0xff]
        %v359 = vld [vmem:[%s295 + $0x40] sm:$0xff]
        %v360 = vld [vmem:[%s295 + $0x48] sm:$0xff]
        %v361 = vld [vmem:[%s295 + $0x50] sm:$0xff]
        %v362 = vld [vmem:[%s295 + $0x58] sm:$0xff]
        %v363 = vld [vmem:[%s295 + $0x60] sm:$0xff]
        %v364 = vld [vmem:[%s295 + $0x68] sm:$0xff]
        %v365 = vld [vmem:[%s295 + $0x70] sm:$0xff]
        %v366 = vld [vmem:[%s295 + $0x78] sm:$0xff]
        %v367 = vld [vmem:[%s295 + $0x80] sm:$0xff]
        %v368 = vld [vmem:[%s295 + $0x88] sm:$0xff]
        %v369 = vld [vmem:[%s295 + $0x90] sm:$0xff]
        %v370 = vld [vmem:[%s295 + $0x98] sm:$0xff]
        %v371 = vld [vmem:[%s295 + $0xa0] sm:$0xff]
        %v372 = vld [vmem:[%s295 + $0xa8] sm:$0xff]
        %v373 = vld [vmem:[%s295 + $0xb0] sm:$0xff]
        %v374 = vld [vmem:[%s295 + $0xb8] sm:$0xff]
        %v375 = vld [vmem:[%s295 + $0xc0] sm:$0xff]
        %v376 = vld [vmem:[%s295 + $0xc8] sm:$0xff]
        %v377 = vld [vmem:[%s295 + $0xd0] sm:$0xff]
        %v378 = vld [vmem:[%s295 + $0xd8] sm:$0xff]
        %v379 = vld [vmem:[%s295 + $0xe0] sm:$0xff]
        %v380 = vld [vmem:[%s295 + $0xe8] sm:$0xff]
        %v381 = vld [vmem:[%s295 + $0xf0] sm:$0xff]
        %v382 = vld [vmem:[%s295 + $0xf8] sm:$0xff]
        %v383 = vld [vmem:[%s295 + $0x100] sm:$0xff]
        %v384 = vld [vmem:[%s295 + $0x108] sm:$0xff]
        %v385 = vld [vmem:[%s295 + $0x110] sm:$0xff]
        %v386 = vld [vmem:[%s295 + $0x118] sm:$0xff]
        %v387 = vld [vmem:[%s295 + $0x120] sm:$0xff]
        %v388 = vld [vmem:[%s295 + $0x128] sm:$0xff]
        %v389 = vld [vmem:[%s295 + $0x130] sm:$0xff]
        %v390 = vld [vmem:[%s295 + $0x138] sm:$0xff]
        %v391 = vld [vmem:[%s295 + $0x140] sm:$0xff]
        %v392 = vld [vmem:[%s295 + $0x148] sm:$0xff]
        %v393 = vld [vmem:[%s295 + $0x150] sm:$0xff]
        %v394 = vld [vmem:[%s295 + $0x158] sm:$0xff]
        %v395 = vld [vmem:[%s295 + $0x160] sm:$0xff]
        %v396 = vld [vmem:[%s295 + $0x168] sm:$0xff]
        %v397 = vld [vmem:[%s295 + $0x170] sm:$0xff]
        %v398 = vld [vmem:[%s295 + $0x178] sm:$0xff]
        %v399 = vld [vmem:[%s295 + $0x180] sm:$0xff]
        %v400 = vld [vmem:[%s295 + $0x188] sm:$0xff]
        %v401 = vld [vmem:[%s295 + $0x190] sm:$0xff]
        %v402 = vld [vmem:[%s295 + $0x198] sm:$0xff]
        %v403 = vld [vmem:[%s295 + $0x1a0] sm:$0xff]
        %v404 = vld [vmem:[%s295 + $0x1a8] sm:$0xff]
        %v405 = vld [vmem:[%s295 + $0x1b0] sm:$0xff]
        %v406 = vld [vmem:[%s295 + $0x1b8] sm:$0xff]
        %v407 = vld [vmem:[%s295 + $0x1c0] sm:$0xff]
        %v408 = vld [vmem:[%s295 + $0x1c8] sm:$0xff]
        %v409 = vld [vmem:[%s295 + $0x1d0] sm:$0xff]
        %v410 = vld [vmem:[%s295 + $0x1d8] sm:$0xff]
        %v411 = vld [vmem:[%s295 + $0x1e0] sm:$0xff]
        %v412 = vld [vmem:[%s295 + $0x1e8] sm:$0xff]
        %v413 = vld [vmem:[%s295 + $0x1f0] sm:$0xff]
        %v414 = vld [vmem:[%s295 + $0x1f8] sm:$0xff]
        %v415 = vld [vmem:[%s295 + $0x200] sm:$0xff]
        %v416 = vld [vmem:[%s295 + $0x208] sm:$0xff]
        %v417 = vld [vmem:[%s295 + $0x210] sm:$0xff]
        %v418 = vld [vmem:[%s295 + $0x218] sm:$0xff]
        %v419 = vld [vmem:[%s295 + $0x220] sm:$0xff]
        %v420 = vld [vmem:[%s295 + $0x228] sm:$0xff]
        %v421 = vld [vmem:[%s295 + $0x230] sm:$0xff]
        %v422 = vld [vmem:[%s295 + $0x238] sm:$0xff]
        %v423 = vld [vmem:[%s295 + $0x240] sm:$0xff]
        %v424 = vld [vmem:[%s295 + $0x248] sm:$0xff]
        %v425 = vld [vmem:[%s295 + $0x250] sm:$0xff]
        %v426 = vld [vmem:[%s295 + $0x258] sm:$0xff]
        %v427 = vld [vmem:[%s295 + $0x260] sm:$0xff]
        %v428 = vld [vmem:[%s295 + $0x268] sm:$0xff]
        %v429 = vld [vmem:[%s295 + $0x270] sm:$0xff]
        %v430 = vld [vmem:[%s295 + $0x278] sm:$0xff]
        %v431 = vld [vmem:[%s295 + $0x280] sm:$0xff]
        %v432 = vld [vmem:[%s295 + $0x288] sm:$0xff]
        %v433 = vld [vmem:[%s295 + $0x290] sm:$0xff]
        %v434 = vld [vmem:[%s295 + $0x298] sm:$0xff]
        %v435 = vld [vmem:[%s295 + $0x2a0] sm:$0xff]
        %v436 = vld [vmem:[%s295 + $0x2a8] sm:$0xff]
        %v437 = vld [vmem:[%s295 + $0x2b0] sm:$0xff]
        %v438 = vld [vmem:[%s295 + $0x2b8] sm:$0xff]
        %v439 = vld [vmem:[%s295 + $0x2c0] sm:$0xff]
        %v440 = vld [vmem:[%s295 + $0x2c8] sm:$0xff]
        %v441 = vld [vmem:[%s295 + $0x2d0] sm:$0xff]
        %v442 = vld [vmem:[%s295 + $0x2d8] sm:$0xff]
        %v443 = vld [vmem:[%s295 + $0x2e0] sm:$0xff]
        %v444 = vld [vmem:[%s295 + $0x2e8] sm:$0xff]
        %v445 = vld [vmem:[%s295 + $0x2f0] sm:$0xff]
        %v446 = vld [vmem:[%s295 + $0x2f8] sm:$0xff]
        %v447 = vld [vmem:[%s295 + $0x300] sm:$0xff]
        %v448 = vld [vmem:[%s295 + $0x308] sm:$0xff]
        %v449 = vld [vmem:[%s295 + $0x310] sm:$0xff]
        %v450 = vld [vmem:[%s295 + $0x318] sm:$0xff]
        %v451 = vld [vmem:[%s295 + $0x320] sm:$0xff]
        %v452 = vld [vmem:[%s295 + $0x328] sm:$0xff]
        %v453 = vld [vmem:[%s295 + $0x330] sm:$0xff]
        %v454 = vld [vmem:[%s295 + $0x338] sm:$0xff]
        %v455 = vld [vmem:[%s295 + $0x340] sm:$0xff]
        %v456 = vld [vmem:[%s295 + $0x348] sm:$0xff]
        %v457 = vld [vmem:[%s295 + $0x350] sm:$0xff]
        %v458 = vld [vmem:[%s295 + $0x358] sm:$0xff]
        %v459 = vld [vmem:[%s295 + $0x360] sm:$0xff]
        %v460 = vld [vmem:[%s295 + $0x368] sm:$0xff]
        %v461 = vld [vmem:[%s295 + $0x370] sm:$0xff]
        %v462 = vld [vmem:[%s295 + $0x378] sm:$0xff]
        %v463 = vld [vmem:[%s295 + $0x380] sm:$0xff]
        %v464 = vld [vmem:[%s295 + $0x388] sm:$0xff]
        %v465 = vld [vmem:[%s295 + $0x390] sm:$0xff]
        %v466 = vld [vmem:[%s295 + $0x398] sm:$0xff]
        %v467 = vld [vmem:[%s295 + $0x3a0] sm:$0xff]
        %v468 = vld [vmem:[%s295 + $0x3a8] sm:$0xff]
        %v469 = vld [vmem:[%s295 + $0x3b0] sm:$0xff]
        %v470 = vld [vmem:[%s295 + $0x3b8] sm:$0xff]
        %v471 = vld [vmem:[%s295 + $0x3c0] sm:$0xff]
        %v472 = vld [vmem:[%s295 + $0x3c8] sm:$0xff]
        %v473 = vld [vmem:[%s295 + $0x3d0] sm:$0xff]
        %v474 = vld [vmem:[%s295 + $0x3d8] sm:$0xff]
        %v475 = vld [vmem:[%s295 + $0x3e0] sm:$0xff]
        %v476 = vld [vmem:[%s295 + $0x3e8] sm:$0xff]
        %v477 = vld [vmem:[%s295 + $0x3f0] sm:$0xff]
        %v478 = vld [vmem:[%s295 + $0x3f8] sm:$0xff]
        %v479 = vld [vmem:[%s295 + $0x400] sm:$0xff]
        %v480 = vld [vmem:[%s295 + $0x408] sm:$0xff]
        %v481 = vld [vmem:[%s295 + $0x410] sm:$0xff]
        %v482 = vld [vmem:[%s295 + $0x418] sm:$0xff]
        %v483 = vld [vmem:[%s295 + $0x420] sm:$0xff]
        %v484 = vld [vmem:[%s295 + $0x428] sm:$0xff]
        %v485 = vld [vmem:[%s295 + $0x430] sm:$0xff]
        %v486 = vld [vmem:[%s295 + $0x438] sm:$0xff]
        %v487 = vld [vmem:[%s295 + $0x440] sm:$0xff]
        %v488 = vld [vmem:[%s295 + $0x448] sm:$0xff]
        %v489 = vld [vmem:[%s295 + $0x450] sm:$0xff]
        %v490 = vld [vmem:[%s295 + $0x458] sm:$0xff]
        %v491 = vld [vmem:[%s295 + $0x460] sm:$0xff]
        %v492 = vld [vmem:[%s295 + $0x468] sm:$0xff]
        %v493 = vld [vmem:[%s295 + $0x470] sm:$0xff]
        %v494 = vld [vmem:[%s295 + $0x478] sm:$0xff]
        %v495 = vld [vmem:[%s295 + $0x480] sm:$0xff]
        %v496 = vld [vmem:[%s295 + $0x488] sm:$0xff]
        %v497 = vld [vmem:[%s295 + $0x490] sm:$0xff]
        %v498 = vld [vmem:[%s295 + $0x498] sm:$0xff]
        %v499 = vld [vmem:[%s295 + $0x4a0] sm:$0xff]
        %v500 = vld [vmem:[%s295 + $0x4a8] sm:$0xff]
        %v501 = vld [vmem:[%s295 + $0x4b0] sm:$0xff]
        %v502 = vld [vmem:[%s295 + $0x4b8] sm:$0xff]
        %v503 = vld [vmem:[%s295 + $0x4c0] sm:$0xff]
        %v504 = vld [vmem:[%s295 + $0x4c8] sm:$0xff]
        %v505 = vld [vmem:[%s295 + $0x4d0] sm:$0xff]
        %v506 = vld [vmem:[%s295 + $0x4d8] sm:$0xff]
        %v507 = vld [vmem:[%s295 + $0x4e0] sm:$0xff]
        %v508 = vld [vmem:[%s295 + $0x4e8] sm:$0xff]
        %v509 = vld [vmem:[%s295 + $0x4f0] sm:$0xff]
        %v510 = vld [vmem:[%s295 + $0x4f8] sm:$0xff]
        %v511 = vld [vmem:[%s295 + $0x500] sm:$0xff]
        %v512 = vld [vmem:[%s295 + $0x508] sm:$0xff]
        %v513 = vld [vmem:[%s295 + $0x510] sm:$0xff]
        %v514 = vld [vmem:[%s295 + $0x518] sm:$0xff]
        %v515 = vld [vmem:[%s295 + $0x520] sm:$0xff]
        %v516 = vld [vmem:[%s295 + $0x528] sm:$0xff]
        %v517 = vld [vmem:[%s295 + $0x530] sm:$0xff]
        %v518 = vld [vmem:[%s295 + $0x538] sm:$0xff]
        %v519 = vld [vmem:[%s295 + $0x540] sm:$0xff]
        %v520 = vld [vmem:[%s295 + $0x548] sm:$0xff]
        %v521 = vld [vmem:[%s295 + $0x550] sm:$0xff]
        %v522 = vld [vmem:[%s295 + $0x558] sm:$0xff]
        %v523 = vld [vmem:[%s295 + $0x560] sm:$0xff]
        %v524 = vld [vmem:[%s295 + $0x568] sm:$0xff]
        %v525 = vld [vmem:[%s295 + $0x570] sm:$0xff]
        %v526 = vld [vmem:[%s295 + $0x578] sm:$0xff]
        %v527 = vld [vmem:[%s295 + $0x580] sm:$0xff]
        %v528 = vld [vmem:[%s295 + $0x588] sm:$0xff]
        %v529 = vld [vmem:[%s295 + $0x590] sm:$0xff]
        %v530 = vld [vmem:[%s295 + $0x598] sm:$0xff]
        %v531 = vld [vmem:[%s295 + $0x5a0] sm:$0xff]
        %v532 = vld [vmem:[%s295 + $0x5a8] sm:$0xff]
        %v533 = vld [vmem:[%s295 + $0x5b0] sm:$0xff]
        %v534 = vld [vmem:[%s295 + $0x5b8] sm:$0xff]
        %v535 = vld [vmem:[%s295 + $0x5c0] sm:$0xff]
        %v536 = vld [vmem:[%s295 + $0x5c8] sm:$0xff]
        %v537 = vld [vmem:[%s295 + $0x5d0] sm:$0xff]
        %v538 = vld [vmem:[%s295 + $0x5d8] sm:$0xff]
        %v539 = vld [vmem:[%s295 + $0x5e0] sm:$0xff]
        %v540 = vld [vmem:[%s295 + $0x5e8] sm:$0xff]
        %v541 = vld [vmem:[%s295 + $0x5f0] sm:$0xff]
        %v542 = vld [vmem:[%s295 + $0x5f8] sm:$0xff]
        %v543 = vld [vmem:[%s295 + $0x600] sm:$0xff]
        %v544 = vld [vmem:[%s295 + $0x608] sm:$0xff]
        %v545 = vld [vmem:[%s295 + $0x610] sm:$0xff]
        %v546 = vld [vmem:[%s295 + $0x618] sm:$0xff]
        %v547 = vld [vmem:[%s295 + $0x620] sm:$0xff]
        %v548 = vld [vmem:[%s295 + $0x628] sm:$0xff]
        %v549 = vld [vmem:[%s295 + $0x630] sm:$0xff]
        %v550 = vld [vmem:[%s295 + $0x638] sm:$0xff]
        %v551 = vld [vmem:[%s295 + $0x640] sm:$0xff]
        %v552 = vld [vmem:[%s295 + $0x648] sm:$0xff]
        %v553 = vld [vmem:[%s295 + $0x650] sm:$0xff]
        %v554 = vld [vmem:[%s295 + $0x658] sm:$0xff]
        %v555 = vld [vmem:[%s295 + $0x660] sm:$0xff]
        %v556 = vld [vmem:[%s295 + $0x668] sm:$0xff]
        %v557 = vld [vmem:[%s295 + $0x670] sm:$0xff]
        %v558 = vld [vmem:[%s295 + $0x678] sm:$0xff]
        %v559 = vld [vmem:[%s295 + $0x680] sm:$0xff]
        %v560 = vld [vmem:[%s295 + $0x688] sm:$0xff]
        %v561 = vld [vmem:[%s295 + $0x690] sm:$0xff]
        %v562 = vld [vmem:[%s295 + $0x698] sm:$0xff]
        %v563 = vld [vmem:[%s295 + $0x6a0] sm:$0xff]
        %v564 = vld [vmem:[%s295 + $0x6a8] sm:$0xff]
        %v565 = vld [vmem:[%s295 + $0x6b0] sm:$0xff]
        %v566 = vld [vmem:[%s295 + $0x6b8] sm:$0xff]
        %v567 = vld [vmem:[%s295 + $0x6c0] sm:$0xff]
        %v568 = vld [vmem:[%s295 + $0x6c8] sm:$0xff]
        %v569 = vld [vmem:[%s295 + $0x6d0] sm:$0xff]
        %v570 = vld [vmem:[%s295 + $0x6d8] sm:$0xff]
        %v571 = vld [vmem:[%s295 + $0x6e0] sm:$0xff]
        %v572 = vld [vmem:[%s295 + $0x6e8] sm:$0xff]
        %v573 = vld [vmem:[%s295 + $0x6f0] sm:$0xff]
        %v574 = vld [vmem:[%s295 + $0x6f8] sm:$0xff]
        %v575 = vld [vmem:[%s295 + $0x700] sm:$0xff]
        %v576 = vld [vmem:[%s295 + $0x708] sm:$0xff]
        %v577 = vld [vmem:[%s295 + $0x710] sm:$0xff]
        %v578 = vld [vmem:[%s295 + $0x718] sm:$0xff]
        %v579 = vld [vmem:[%s295 + $0x720] sm:$0xff]
        %v580 = vld [vmem:[%s295 + $0x728] sm:$0xff]
        %v581 = vld [vmem:[%s295 + $0x730] sm:$0xff]
        %v582 = vld [vmem:[%s295 + $0x738] sm:$0xff]
        %v583 = vld [vmem:[%s295 + $0x740] sm:$0xff]
        %v584 = vld [vmem:[%s295 + $0x748] sm:$0xff]
        %v585 = vld [vmem:[%s295 + $0x750] sm:$0xff]
        %v586 = vld [vmem:[%s295 + $0x758] sm:$0xff]
        %v587 = vld [vmem:[%s295 + $0x760] sm:$0xff]
        %v588 = vld [vmem:[%s295 + $0x768] sm:$0xff]
        %v589 = vld [vmem:[%s295 + $0x770] sm:$0xff]
        %v590 = vld [vmem:[%s295 + $0x778] sm:$0xff]
        %v591 = vld [vmem:[%s295 + $0x780] sm:$0xff]
        %v592 = vld [vmem:[%s295 + $0x788] sm:$0xff]
        %v593 = vld [vmem:[%s295 + $0x790] sm:$0xff]
        %v594 = vld [vmem:[%s295 + $0x798] sm:$0xff]
        %v595 = vld [vmem:[%s295 + $0x7a0] sm:$0xff]
        %v596 = vld [vmem:[%s295 + $0x7a8] sm:$0xff]
        %v597 = vld [vmem:[%s295 + $0x7b0] sm:$0xff]
        %v598 = vld [vmem:[%s295 + $0x7b8] sm:$0xff]
        %v599 = vld [vmem:[%s295 + $0x7c0] sm:$0xff]
        %v600 = vld [vmem:[%s295 + $0x7c8] sm:$0xff]
        %v601 = vld [vmem:[%s295 + $0x7d0] sm:$0xff]
        %v602 = vld [vmem:[%s295 + $0x7d8] sm:$0xff]
        %v603 = vld [vmem:[%s295 + $0x7e0] sm:$0xff]
        %v604 = vld [vmem:[%s295 + $0x7e8] sm:$0xff]
        %v605 = vld [vmem:[%s295 + $0x7f0] sm:$0xff]
        %v606 = vld [vmem:[%s295 + $0x7f8] sm:$0xff]
        %v607 = vld [vmem:[%s295 + $0x800] sm:$0xff]
        %v608 = vld [vmem:[%s295 + $0x808] sm:$0xff]
        %v609 = vld [vmem:[%s295 + $0x810] sm:$0xff]
        %v610 = vld [vmem:[%s295 + $0x818] sm:$0xff]
        %v611 = vld [vmem:[%s295 + $0x820] sm:$0xff]
        %v612 = vld [vmem:[%s295 + $0x828] sm:$0xff]
        %v613 = vld [vmem:[%s295 + $0x830] sm:$0xff]
        %v614 = vld [vmem:[%s295 + $0x838] sm:$0xff]
        %v615 = vld [vmem:[%s295 + $0x840] sm:$0xff]
        %v616 = vld [vmem:[%s295 + $0x848] sm:$0xff]
        %v617 = vld [vmem:[%s295 + $0x850] sm:$0xff]
        %v618 = vld [vmem:[%s295 + $0x858] sm:$0xff]
        %v619 = vld [vmem:[%s295 + $0x860] sm:$0xff]
        %v620 = vld [vmem:[%s295 + $0x868] sm:$0xff]
        %v621 = vld [vmem:[%s295 + $0x870] sm:$0xff]
        %v622 = vld [vmem:[%s295 + $0x878] sm:$0xff]
        %v623 = vld [vmem:[%s295 + $0x880] sm:$0xff]
        %v624 = vld [vmem:[%s295 + $0x888] sm:$0xff]
        %v625 = vld [vmem:[%s295 + $0x890] sm:$0xff]
        %v626 = vld [vmem:[%s295 + $0x898] sm:$0xff]
        %v627 = vld [vmem:[%s295 + $0x8a0] sm:$0xff]
        %v628 = vld [vmem:[%s295 + $0x8a8] sm:$0xff]
        %v629 = vld [vmem:[%s295 + $0x8b0] sm:$0xff]
        %v630 = vld [vmem:[%s295 + $0x8b8] sm:$0xff]
        %v631 = vld [vmem:[%s295 + $0x8c0] sm:$0xff]
        %v632 = vld [vmem:[%s295 + $0x8c8] sm:$0xff]
        %v633 = vld [vmem:[%s295 + $0x8d0] sm:$0xff]
        %v634 = vld [vmem:[%s295 + $0x8d8] sm:$0xff]
        %v635 = vld [vmem:[%s295 + $0x8e0] sm:$0xff]
        %v636 = vld [vmem:[%s295 + $0x8e8] sm:$0xff]
        %v637 = vld [vmem:[%s295 + $0x8f0] sm:$0xff]
        %v638 = vld [vmem:[%s295 + $0x8f8] sm:$0xff]
        %v639 = vld [vmem:[%s295 + $0x900] sm:$0xff]
        %v640 = vld [vmem:[%s295 + $0x908] sm:$0xff]
        %v641 = vld [vmem:[%s295 + $0x910] sm:$0xff]
        %v642 = vld [vmem:[%s295 + $0x918] sm:$0xff]
        %v643 = vld [vmem:[%s295 + $0x920] sm:$0xff]
        %v644 = vld [vmem:[%s295 + $0x928] sm:$0xff]
        %v645 = vld [vmem:[%s295 + $0x930] sm:$0xff]
        %v646 = vld [vmem:[%s295 + $0x938] sm:$0xff]
        %v647 = vld [vmem:[%s295 + $0x940] sm:$0xff]
        %v648 = vld [vmem:[%s295 + $0x948] sm:$0xff]
        %v649 = vld [vmem:[%s295 + $0x950] sm:$0xff]
        %v650 = vld [vmem:[%s295 + $0x958] sm:$0xff]
        %v651 = vld [vmem:[%s295 + $0x960] sm:$0xff]
        %v652 = vld [vmem:[%s295 + $0x968] sm:$0xff]
        %v653 = vld [vmem:[%s295 + $0x970] sm:$0xff]
        %v654 = vld [vmem:[%s295 + $0x978] sm:$0xff]
        %v655 = vld [vmem:[%s295 + $0x980] sm:$0xff]
        %v656 = vld [vmem:[%s295 + $0x988] sm:$0xff]
        %v657 = vld [vmem:[%s295 + $0x990] sm:$0xff]
        %v658 = vld [vmem:[%s295 + $0x998] sm:$0xff]
        %v659 = vld [vmem:[%s295 + $0x9a0] sm:$0xff]
        %v660 = vld [vmem:[%s295 + $0x9a8] sm:$0xff]
        %v661 = vld [vmem:[%s295 + $0x9b0] sm:$0xff]
        %v662 = vld [vmem:[%s295 + $0x9b8] sm:$0xff]
        %v663 = vld [vmem:[%s295 + $0x9c0] sm:$0xff]
        %v664 = vld [vmem:[%s295 + $0x9c8] sm:$0xff]
        %v665 = vld [vmem:[%s295 + $0x9d0] sm:$0xff]
        %v666 = vld [vmem:[%s295 + $0x9d8] sm:$0xff]
        %v667 = vld [vmem:[%s295 + $0x9e0] sm:$0xff]
        %v668 = vld [vmem:[%s295 + $0x9e8] sm:$0xff]
        %v669 = vld [vmem:[%s295 + $0x9f0] sm:$0xff]
        %v670 = vld [vmem:[%s295 + $0x9f8] sm:$0xff]
        %v674 = vcombine.high %v347, %v347
        %v676 = vunpack.c.l.s4 1966171168
        %v677 = vunpack.c.0.s8 %v676
        %v678 = vlaneseq
        %v679 = vshrl.u32 %v678, 7
        %v680 = vsub.s32 %v677, %v679
        %v681 = vrot.slane %v347, %v680
        %v683 = vunpack.c.l.s4 1966171168
        %v684 = vunpack.c.0.s8 %v683
        %v685 = vlaneseq
        %v686 = vshrl.u32 %v685, 7
        %v687 = vsub.s32 %v684, %v686
        %v688 = vrot.slane %v674, %v687
        %v689 = vcombine.high %v681, %v681
        %v690 = vcombine.high %v688, %v688
        %v692 = vunpack.c.l.s4 1966171168
        %v693 = vunpack.c.0.s8 %v692
        %v694 = vlaneseq
        %v695 = vshrl.u32 %v694, 7
        %v696 = vsub.s32 %v693, %v695
        %v697 = vrot.slane %v681, %v696
        %v699 = vunpack.c.l.s4 1966171168
        %v700 = vunpack.c.0.s8 %v699
        %v701 = vlaneseq
        %v702 = vshrl.u32 %v701, 7
        %v703 = vsub.s32 %v700, %v702
        %v704 = vrot.slane %v688, %v703
        %v706 = vunpack.c.l.s4 1966171168
        %v707 = vunpack.c.0.s8 %v706
        %v708 = vlaneseq
        %v709 = vshrl.u32 %v708, 7
        %v710 = vsub.s32 %v707, %v709
        %v711 = vrot.slane %v689, %v710
        %v713 = vunpack.c.l.s4 1966171168
        %v714 = vunpack.c.0.s8 %v713
        %v715 = vlaneseq
        %v716 = vshrl.u32 %v715, 7
        %v717 = vsub.s32 %v714, %v716
        %v718 = vrot.slane %v690, %v717
        %v719 = vcombine.high %v697, %v697
        %v720 = vcombine.high %v704, %v704
        %v721 = vcombine.high %v711, %v711
        %v722 = vcombine.high %v718, %v718
        %v723 = vcombine.high %v348, %v348
        %v725 = vunpack.c.l.s4 1966171168
        %v726 = vunpack.c.0.s8 %v725
        %v727 = vlaneseq
        %v728 = vshrl.u32 %v727, 7
        %v729 = vsub.s32 %v726, %v728
        %v730 = vrot.slane %v348, %v729
        %v732 = vunpack.c.l.s4 1966171168
        %v733 = vunpack.c.0.s8 %v732
        %v734 = vlaneseq
        %v735 = vshrl.u32 %v734, 7
        %v736 = vsub.s32 %v733, %v735
        %v737 = vrot.slane %v723, %v736
        %v738 = vcombine.high %v730, %v730
        %v739 = vcombine.high %v737, %v737
        %v741 = vunpack.c.l.s4 1966171168
        %v742 = vunpack.c.0.s8 %v741
        %v743 = vlaneseq
        %v744 = vshrl.u32 %v743, 7
        %v745 = vsub.s32 %v742, %v744
        %v746 = vrot.slane %v730, %v745
        %v748 = vunpack.c.l.s4 1966171168
        %v749 = vunpack.c.0.s8 %v748
        %v750 = vlaneseq
        %v751 = vshrl.u32 %v750, 7
        %v752 = vsub.s32 %v749, %v751
        %v753 = vrot.slane %v737, %v752
        %v755 = vunpack.c.l.s4 1966171168
        %v756 = vunpack.c.0.s8 %v755
        %v757 = vlaneseq
        %v758 = vshrl.u32 %v757, 7
        %v759 = vsub.s32 %v756, %v758
        %v760 = vrot.slane %v738, %v759
        %v762 = vunpack.c.l.s4 1966171168
        %v763 = vunpack.c.0.s8 %v762
        %v764 = vlaneseq
        %v765 = vshrl.u32 %v764, 7
        %v766 = vsub.s32 %v763, %v765
        %v767 = vrot.slane %v739, %v766
        %v768 = vcombine.high %v746, %v746
        %v769 = vcombine.high %v753, %v753
        %v770 = vcombine.high %v760, %v760
        %v771 = vcombine.high %v767, %v767
        %v773 = vunpack.c.l.s4 1966171168
        %v774 = vunpack.c.0.s8 %v773
        %v775 = vlaneseq
        %v776 = vshrl.u32 %v775, 7
        %v777 = vsub.s32 %v774, %v776
        %v778 = vrot.slane %v349, %v777
        %v779 = vcombine.high %v778, %v778
        %v781 = vunpack.c.l.s4 1966171168
        %v782 = vunpack.c.0.s8 %v781
        %v783 = vlaneseq
        %v784 = vshrl.u32 %v783, 7
        %v785 = vsub.s32 %v782, %v784
        %v786 = vrot.slane %v778, %v785
        %v788 = vunpack.c.l.s4 1966171168
        %v789 = vunpack.c.0.s8 %v788
        %v790 = vlaneseq
        %v791 = vshrl.u32 %v790, 7
        %v792 = vsub.s32 %v789, %v791
        %v793 = vrot.slane %v779, %v792
        %v794 = vcombine.high %v786, %v786
        %v795 = vcombine.high %v793, %v793
        %v1136 = vunpack.c.l.b16 %v351
        %v1137 = vunpack.c.h.b16 %v351
        %v1138 = vunpack.c.l.b16 %v352
        %v1139 = vunpack.c.h.b16 %v352
        %v1140 = vunpack.c.l.b16 %v353
        %v1141 = vunpack.c.h.b16 %v353
        %v1142 = vunpack.c.l.b16 %v354
        %v1143 = vunpack.c.h.b16 %v354
        %v1144 = vunpack.c.l.b16 %v355
        %v1145 = vunpack.c.h.b16 %v355
        %v1146 = vunpack.c.l.b16 %v356
        %v1147 = vunpack.c.h.b16 %v356
        %v1148 = vunpack.c.l.b16 %v357
        %v1149 = vunpack.c.h.b16 %v357
        %v1150 = vunpack.c.l.b16 %v358
        %v1151 = vunpack.c.h.b16 %v358
        %v1152 = vunpack.c.l.b16 %v359
        %v1153 = vunpack.c.h.b16 %v359
        %v1154 = vunpack.c.l.b16 %v360
        %v1155 = vunpack.c.h.b16 %v360
        %v1156 = vunpack.c.l.b16 %v361
        %v1157 = vunpack.c.h.b16 %v361
        %v1158 = vunpack.c.l.b16 %v362
        %v1159 = vunpack.c.h.b16 %v362
        %v1160 = vunpack.c.l.b16 %v363
        %v1161 = vunpack.c.h.b16 %v363
        %v1162 = vunpack.c.l.b16 %v364
        %v1163 = vunpack.c.h.b16 %v364
        %v1164 = vunpack.c.l.b16 %v365
        %v1165 = vunpack.c.h.b16 %v365
        %v1166 = vunpack.c.l.b16 %v366
        %v1167 = vunpack.c.h.b16 %v366
        %v1168 = vunpack.c.l.b16 %v367
        %v1169 = vunpack.c.h.b16 %v367
        %v1170 = vunpack.c.l.b16 %v368
        %v1171 = vunpack.c.h.b16 %v368
        %v1172 = vunpack.c.l.b16 %v369
        %v1173 = vunpack.c.h.b16 %v369
        %v1174 = vunpack.c.l.b16 %v370
        %v1175 = vunpack.c.h.b16 %v370
        %v1176 = vunpack.c.l.b16 %v371
        %v1177 = vunpack.c.h.b16 %v371
        %v1178 = vunpack.c.l.b16 %v372
        %v1179 = vunpack.c.h.b16 %v372
        %v1180 = vunpack.c.l.b16 %v373
        %v1181 = vunpack.c.h.b16 %v373
        %v1182 = vunpack.c.l.b16 %v374
        %v1183 = vunpack.c.h.b16 %v374
        %v1184 = vunpack.c.l.b16 %v375
        %v1185 = vunpack.c.h.b16 %v375
        %v1186 = vunpack.c.l.b16 %v376
        %v1187 = vunpack.c.h.b16 %v376
        %v1188 = vunpack.c.l.b16 %v377
        %v1189 = vunpack.c.h.b16 %v377
        %v1190 = vunpack.c.l.b16 %v378
        %v1191 = vunpack.c.h.b16 %v378
        %v1192 = vunpack.c.l.b16 %v379
        %v1193 = vunpack.c.h.b16 %v379
        %v1194 = vunpack.c.l.b16 %v380
        %v1195 = vunpack.c.h.b16 %v380
        %v1196 = vunpack.c.l.b16 %v381
        %v1197 = vunpack.c.h.b16 %v381
        %v1198 = vunpack.c.l.b16 %v382
        %v1199 = vunpack.c.h.b16 %v382
        %v1200 = vunpack.c.l.b16 %v383
        %v1201 = vunpack.c.h.b16 %v383
        %v1202 = vunpack.c.l.b16 %v384
        %v1203 = vunpack.c.h.b16 %v384
        %v1204 = vunpack.c.l.b16 %v385
        %v1205 = vunpack.c.h.b16 %v385
        %v1206 = vunpack.c.l.b16 %v386
        %v1207 = vunpack.c.h.b16 %v386
        %v1208 = vunpack.c.l.b16 %v387
        %v1209 = vunpack.c.h.b16 %v387
        %v1210 = vunpack.c.l.b16 %v388
        %v1211 = vunpack.c.h.b16 %v388
        %v1212 = vunpack.c.l.b16 %v389
        %v1213 = vunpack.c.h.b16 %v389
        %v1214 = vunpack.c.l.b16 %v390
        %v1215 = vunpack.c.h.b16 %v390
        %v1216 = vunpack.c.l.b16 %v391
        %v1217 = vunpack.c.h.b16 %v391
        %v1218 = vunpack.c.l.b16 %v392
        %v1219 = vunpack.c.h.b16 %v392
        %v1220 = vunpack.c.l.b16 %v393
        %v1221 = vunpack.c.h.b16 %v393
        %v1222 = vunpack.c.l.b16 %v394
        %v1223 = vunpack.c.h.b16 %v394
        %v1224 = vunpack.c.l.b16 %v395
        %v1225 = vunpack.c.h.b16 %v395
        %v1226 = vunpack.c.l.b16 %v396
        %v1227 = vunpack.c.h.b16 %v396
        %v1228 = vunpack.c.l.b16 %v397
        %v1229 = vunpack.c.h.b16 %v397
        %v1230 = vunpack.c.l.b16 %v398
        %v1231 = vunpack.c.h.b16 %v398
        %v1232 = vunpack.c.l.b16 %v399
        %v1233 = vunpack.c.h.b16 %v399
        %v1234 = vunpack.c.l.b16 %v400
        %v1235 = vunpack.c.h.b16 %v400
        %v1236 = vunpack.c.l.b16 %v401
        %v1237 = vunpack.c.h.b16 %v401
        %v1238 = vunpack.c.l.b16 %v402
        %v1239 = vunpack.c.h.b16 %v402
        %v1240 = vunpack.c.l.b16 %v403
        %v1241 = vunpack.c.h.b16 %v403
        %v1242 = vunpack.c.l.b16 %v404
        %v1243 = vunpack.c.h.b16 %v404
        %v1244 = vunpack.c.l.b16 %v405
        %v1245 = vunpack.c.h.b16 %v405
        %v1246 = vunpack.c.l.b16 %v406
        %v1247 = vunpack.c.h.b16 %v406
        %v1248 = vunpack.c.l.b16 %v407
        %v1249 = vunpack.c.h.b16 %v407
        %v1250 = vunpack.c.l.b16 %v408
        %v1251 = vunpack.c.h.b16 %v408
        %v1252 = vunpack.c.l.b16 %v409
        %v1253 = vunpack.c.h.b16 %v409
        %v1254 = vunpack.c.l.b16 %v410
        %v1255 = vunpack.c.h.b16 %v410
        %v1256 = vunpack.c.l.b16 %v411
        %v1257 = vunpack.c.h.b16 %v411
        %v1258 = vunpack.c.l.b16 %v412
        %v1259 = vunpack.c.h.b16 %v412
        %v1260 = vunpack.c.l.b16 %v413
        %v1261 = vunpack.c.h.b16 %v413
        %v1262 = vunpack.c.l.b16 %v414
        %v1263 = vunpack.c.h.b16 %v414
        %v1264 = vunpack.c.l.b16 %v415
        %v1265 = vunpack.c.h.b16 %v415
        %v1266 = vunpack.c.l.b16 %v416
        %v1267 = vunpack.c.h.b16 %v416
        %v1268 = vunpack.c.l.b16 %v417
        %v1269 = vunpack.c.h.b16 %v417
        %v1270 = vunpack.c.l.b16 %v418
        %v1271 = vunpack.c.h.b16 %v418
        %v1272 = vunpack.c.l.b16 %v419
        %v1273 = vunpack.c.h.b16 %v419
        %v1274 = vunpack.c.l.b16 %v420
        %v1275 = vunpack.c.h.b16 %v420
        %v1276 = vunpack.c.l.b16 %v421
        %v1277 = vunpack.c.h.b16 %v421
        %v1278 = vunpack.c.l.b16 %v422
        %v1279 = vunpack.c.h.b16 %v422
        %v1280 = vunpack.c.l.b16 %v423
        %v1281 = vunpack.c.h.b16 %v423
        %v1282 = vunpack.c.l.b16 %v424
        %v1283 = vunpack.c.h.b16 %v424
        %v1284 = vunpack.c.l.b16 %v425
        %v1285 = vunpack.c.h.b16 %v425
        %v1286 = vunpack.c.l.b16 %v426
        %v1287 = vunpack.c.h.b16 %v426
        %v1288 = vunpack.c.l.b16 %v427
        %v1289 = vunpack.c.h.b16 %v427
        %v1290 = vunpack.c.l.b16 %v428
        %v1291 = vunpack.c.h.b16 %v428
        %v1292 = vunpack.c.l.b16 %v429
        %v1293 = vunpack.c.h.b16 %v429
        %v1294 = vunpack.c.l.b16 %v430
        %v1295 = vunpack.c.h.b16 %v430
        %v1296 = vunpack.c.l.b16 %v431
        %v1297 = vunpack.c.h.b16 %v431
        %v1298 = vunpack.c.l.b16 %v432
        %v1299 = vunpack.c.h.b16 %v432
        %v1300 = vunpack.c.l.b16 %v433
        %v1301 = vunpack.c.h.b16 %v433
        %v1302 = vunpack.c.l.b16 %v434
        %v1303 = vunpack.c.h.b16 %v434
        %v1304 = vunpack.c.l.b16 %v435
        %v1305 = vunpack.c.h.b16 %v435
        %v1306 = vunpack.c.l.b16 %v436
        %v1307 = vunpack.c.h.b16 %v436
        %v1308 = vunpack.c.l.b16 %v437
        %v1309 = vunpack.c.h.b16 %v437
        %v1310 = vunpack.c.l.b16 %v438
        %v1311 = vunpack.c.h.b16 %v438
        %v1312 = vunpack.c.l.b16 %v439
        %v1313 = vunpack.c.h.b16 %v439
        %v1314 = vunpack.c.l.b16 %v440
        %v1315 = vunpack.c.h.b16 %v440
        %v1316 = vunpack.c.l.b16 %v441
        %v1317 = vunpack.c.h.b16 %v441
        %v1318 = vunpack.c.l.b16 %v442
        %v1319 = vunpack.c.h.b16 %v442
        %v1320 = vunpack.c.l.b16 %v443
        %v1321 = vunpack.c.h.b16 %v443
        %v1322 = vunpack.c.l.b16 %v444
        %v1323 = vunpack.c.h.b16 %v444
        %v1324 = vunpack.c.l.b16 %v445
        %v1325 = vunpack.c.h.b16 %v445
        %v1326 = vunpack.c.l.b16 %v446
        %v1327 = vunpack.c.h.b16 %v446
        %v1328 = vunpack.c.l.b16 %v447
        %v1329 = vunpack.c.h.b16 %v447
        %v1330 = vunpack.c.l.b16 %v448
        %v1331 = vunpack.c.h.b16 %v448
        %v1332 = vunpack.c.l.b16 %v449
        %v1333 = vunpack.c.h.b16 %v449
        %v1334 = vunpack.c.l.b16 %v450
        %v1335 = vunpack.c.h.b16 %v450
        %v1336 = vunpack.c.l.b16 %v451
        %v1337 = vunpack.c.h.b16 %v451
        %v1338 = vunpack.c.l.b16 %v452
        %v1339 = vunpack.c.h.b16 %v452
        %v1340 = vunpack.c.l.b16 %v453
        %v1341 = vunpack.c.h.b16 %v453
        %v1342 = vunpack.c.l.b16 %v454
        %v1343 = vunpack.c.h.b16 %v454
        %v1344 = vunpack.c.l.b16 %v455
        %v1345 = vunpack.c.h.b16 %v455
        %v1346 = vunpack.c.l.b16 %v456
        %v1347 = vunpack.c.h.b16 %v456
        %v1348 = vunpack.c.l.b16 %v457
        %v1349 = vunpack.c.h.b16 %v457
        %v1350 = vunpack.c.l.b16 %v458
        %v1351 = vunpack.c.h.b16 %v458
        %v1352 = vunpack.c.l.b16 %v459
        %v1353 = vunpack.c.h.b16 %v459
        %v1354 = vunpack.c.l.b16 %v460
        %v1355 = vunpack.c.h.b16 %v460
        %v1356 = vunpack.c.l.b16 %v461
        %v1357 = vunpack.c.h.b16 %v461
        %v1358 = vunpack.c.l.b16 %v462
        %v1359 = vunpack.c.h.b16 %v462
        %v1360 = vunpack.c.l.b16 %v463
        %v1361 = vunpack.c.h.b16 %v463
        %v1362 = vunpack.c.l.b16 %v464
        %v1363 = vunpack.c.h.b16 %v464
        %v1364 = vunpack.c.l.b16 %v465
        %v1365 = vunpack.c.h.b16 %v465
        %v1366 = vunpack.c.l.b16 %v466
        %v1367 = vunpack.c.h.b16 %v466
        %v1368 = vunpack.c.l.b16 %v467
        %v1369 = vunpack.c.h.b16 %v467
        %v1370 = vunpack.c.l.b16 %v468
        %v1371 = vunpack.c.h.b16 %v468
        %v1372 = vunpack.c.l.b16 %v469
        %v1373 = vunpack.c.h.b16 %v469
        %v1374 = vunpack.c.l.b16 %v470
        %v1375 = vunpack.c.h.b16 %v470
        %v1376 = vunpack.c.l.b16 %v471
        %v1377 = vunpack.c.h.b16 %v471
        %v1378 = vunpack.c.l.b16 %v472
        %v1379 = vunpack.c.h.b16 %v472
        %v1380 = vunpack.c.l.b16 %v473
        %v1381 = vunpack.c.h.b16 %v473
        %v1382 = vunpack.c.l.b16 %v474
        %v1383 = vunpack.c.h.b16 %v474
        %v1384 = vunpack.c.l.b16 %v475
        %v1385 = vunpack.c.h.b16 %v475
        %v1386 = vunpack.c.l.b16 %v476
        %v1387 = vunpack.c.h.b16 %v476
        %v1388 = vunpack.c.l.b16 %v477
        %v1389 = vunpack.c.h.b16 %v477
        %v1390 = vunpack.c.l.b16 %v478
        %v1391 = vunpack.c.h.b16 %v478
        %v1392 = vunpack.c.l.b16 %v479
        %v1393 = vunpack.c.h.b16 %v479
        %v1394 = vunpack.c.l.b16 %v480
        %v1395 = vunpack.c.h.b16 %v480
        %v1396 = vunpack.c.l.b16 %v481
        %v1397 = vunpack.c.h.b16 %v481
        %v1398 = vunpack.c.l.b16 %v482
        %v1399 = vunpack.c.h.b16 %v482
        %v1400 = vunpack.c.l.b16 %v483
        %v1401 = vunpack.c.h.b16 %v483
        %v1402 = vunpack.c.l.b16 %v484
        %v1403 = vunpack.c.h.b16 %v484
        %v1404 = vunpack.c.l.b16 %v485
        %v1405 = vunpack.c.h.b16 %v485
        %v1406 = vunpack.c.l.b16 %v486
        %v1407 = vunpack.c.h.b16 %v486
        %v1408 = vunpack.c.l.b16 %v487
        %v1409 = vunpack.c.h.b16 %v487
        %v1410 = vunpack.c.l.b16 %v488
        %v1411 = vunpack.c.h.b16 %v488
        %v1412 = vunpack.c.l.b16 %v489
        %v1413 = vunpack.c.h.b16 %v489
        %v1414 = vunpack.c.l.b16 %v490
        %v1415 = vunpack.c.h.b16 %v490
        %v1416 = vunpack.c.l.b16 %v491
        %v1417 = vunpack.c.h.b16 %v491
        %v1418 = vunpack.c.l.b16 %v492
        %v1419 = vunpack.c.h.b16 %v492
        %v1420 = vunpack.c.l.b16 %v493
        %v1421 = vunpack.c.h.b16 %v493
        %v1422 = vunpack.c.l.b16 %v494
        %v1423 = vunpack.c.h.b16 %v494
        %v1424 = vunpack.c.l.b16 %v495
        %v1425 = vunpack.c.h.b16 %v495
        %v1426 = vunpack.c.l.b16 %v496
        %v1427 = vunpack.c.h.b16 %v496
        %v1428 = vunpack.c.l.b16 %v497
        %v1429 = vunpack.c.h.b16 %v497
        %v1430 = vunpack.c.l.b16 %v498
        %v1431 = vunpack.c.h.b16 %v498
        %v1432 = vunpack.c.l.b16 %v499
        %v1433 = vunpack.c.h.b16 %v499
        %v1434 = vunpack.c.l.b16 %v500
        %v1435 = vunpack.c.h.b16 %v500
        %v1436 = vunpack.c.l.b16 %v501
        %v1437 = vunpack.c.h.b16 %v501
        %v1438 = vunpack.c.l.b16 %v502
        %v1439 = vunpack.c.h.b16 %v502
        %v1440 = vunpack.c.l.b16 %v503
        %v1441 = vunpack.c.h.b16 %v503
        %v1442 = vunpack.c.l.b16 %v504
        %v1443 = vunpack.c.h.b16 %v504
        %v1444 = vunpack.c.l.b16 %v505
        %v1445 = vunpack.c.h.b16 %v505
        %v1446 = vunpack.c.l.b16 %v506
        %v1447 = vunpack.c.h.b16 %v506
        %v1448 = vunpack.c.l.b16 %v507
        %v1449 = vunpack.c.h.b16 %v507
        %v1450 = vunpack.c.l.b16 %v508
        %v1451 = vunpack.c.h.b16 %v508
        %v1452 = vunpack.c.l.b16 %v509
        %v1453 = vunpack.c.h.b16 %v509
        %v1454 = vunpack.c.l.b16 %v510
        %v1455 = vunpack.c.h.b16 %v510
        %v1456 = vunpack.c.l.b16 %v511
        %v1457 = vunpack.c.h.b16 %v511
        %v1458 = vunpack.c.l.b16 %v512
        %v1459 = vunpack.c.h.b16 %v512
        %v1460 = vunpack.c.l.b16 %v513
        %v1461 = vunpack.c.h.b16 %v513
        %v1462 = vunpack.c.l.b16 %v514
        %v1463 = vunpack.c.h.b16 %v514
        %v1464 = vunpack.c.l.b16 %v515
        %v1465 = vunpack.c.h.b16 %v515
        %v1466 = vunpack.c.l.b16 %v516
        %v1467 = vunpack.c.h.b16 %v516
        %v1468 = vunpack.c.l.b16 %v517
        %v1469 = vunpack.c.h.b16 %v517
        %v1470 = vunpack.c.l.b16 %v518
        %v1471 = vunpack.c.h.b16 %v518
        %v1472 = vunpack.c.l.b16 %v519
        %v1473 = vunpack.c.h.b16 %v519
        %v1474 = vunpack.c.l.b16 %v520
        %v1475 = vunpack.c.h.b16 %v520
        %v1476 = vunpack.c.l.b16 %v521
        %v1477 = vunpack.c.h.b16 %v521
        %v1478 = vunpack.c.l.b16 %v522
        %v1479 = vunpack.c.h.b16 %v522
        %v1480 = vunpack.c.l.b16 %v523
        %v1481 = vunpack.c.h.b16 %v523
        %v1482 = vunpack.c.l.b16 %v524
        %v1483 = vunpack.c.h.b16 %v524
        %v1484 = vunpack.c.l.b16 %v525
        %v1485 = vunpack.c.h.b16 %v525
        %v1486 = vunpack.c.l.b16 %v526
        %v1487 = vunpack.c.h.b16 %v526
        %v1488 = vunpack.c.l.b16 %v527
        %v1489 = vunpack.c.h.b16 %v527
        %v1490 = vunpack.c.l.b16 %v528
        %v1491 = vunpack.c.h.b16 %v528
        %v1492 = vunpack.c.l.b16 %v529
        %v1493 = vunpack.c.h.b16 %v529
        %v1494 = vunpack.c.l.b16 %v530
        %v1495 = vunpack.c.h.b16 %v530
        %v1496 = vunpack.c.l.b16 %v531
        %v1497 = vunpack.c.h.b16 %v531
        %v1498 = vunpack.c.l.b16 %v532
        %v1499 = vunpack.c.h.b16 %v532
        %v1500 = vunpack.c.l.b16 %v533
        %v1501 = vunpack.c.h.b16 %v533
        %v1502 = vunpack.c.l.b16 %v534
        %v1503 = vunpack.c.h.b16 %v534
        %v1504 = vunpack.c.l.b16 %v535
        %v1505 = vunpack.c.h.b16 %v535
        %v1506 = vunpack.c.l.b16 %v536
        %v1507 = vunpack.c.h.b16 %v536
        %v1508 = vunpack.c.l.b16 %v537
        %v1509 = vunpack.c.h.b16 %v537
        %v1510 = vunpack.c.l.b16 %v538
        %v1511 = vunpack.c.h.b16 %v538
        %v1512 = vunpack.c.l.b16 %v539
        %v1513 = vunpack.c.h.b16 %v539
        %v1514 = vunpack.c.l.b16 %v540
        %v1515 = vunpack.c.h.b16 %v540
        %v1516 = vunpack.c.l.b16 %v541
        %v1517 = vunpack.c.h.b16 %v541
        %v1518 = vunpack.c.l.b16 %v542
        %v1519 = vunpack.c.h.b16 %v542
        %v1520 = vunpack.c.l.b16 %v543
        %v1521 = vunpack.c.h.b16 %v543
        %v1522 = vunpack.c.l.b16 %v544
        %v1523 = vunpack.c.h.b16 %v544
        %v1524 = vunpack.c.l.b16 %v545
        %v1525 = vunpack.c.h.b16 %v545
        %v1526 = vunpack.c.l.b16 %v546
        %v1527 = vunpack.c.h.b16 %v546
        %v1528 = vunpack.c.l.b16 %v547
        %v1529 = vunpack.c.h.b16 %v547
        %v1530 = vunpack.c.l.b16 %v548
        %v1531 = vunpack.c.h.b16 %v548
        %v1532 = vunpack.c.l.b16 %v549
        %v1533 = vunpack.c.h.b16 %v549
        %v1534 = vunpack.c.l.b16 %v550
        %v1535 = vunpack.c.h.b16 %v550
        %v1536 = vunpack.c.l.b16 %v551
        %v1537 = vunpack.c.h.b16 %v551
        %v1538 = vunpack.c.l.b16 %v552
        %v1539 = vunpack.c.h.b16 %v552
        %v1540 = vunpack.c.l.b16 %v553
        %v1541 = vunpack.c.h.b16 %v553
        %v1542 = vunpack.c.l.b16 %v554
        %v1543 = vunpack.c.h.b16 %v554
        %v1544 = vunpack.c.l.b16 %v555
        %v1545 = vunpack.c.h.b16 %v555
        %v1546 = vunpack.c.l.b16 %v556
        %v1547 = vunpack.c.h.b16 %v556
        %v1548 = vunpack.c.l.b16 %v557
        %v1549 = vunpack.c.h.b16 %v557
        %v1550 = vunpack.c.l.b16 %v558
        %v1551 = vunpack.c.h.b16 %v558
        %v1552 = vunpack.c.l.b16 %v559
        %v1553 = vunpack.c.h.b16 %v559
        %v1554 = vunpack.c.l.b16 %v560
        %v1555 = vunpack.c.h.b16 %v560
        %v1556 = vunpack.c.l.b16 %v561
        %v1557 = vunpack.c.h.b16 %v561
        %v1558 = vunpack.c.l.b16 %v562
        %v1559 = vunpack.c.h.b16 %v562
        %v1560 = vunpack.c.l.b16 %v563
        %v1561 = vunpack.c.h.b16 %v563
        %v1562 = vunpack.c.l.b16 %v564
        %v1563 = vunpack.c.h.b16 %v564
        %v1564 = vunpack.c.l.b16 %v565
        %v1565 = vunpack.c.h.b16 %v565
        %v1566 = vunpack.c.l.b16 %v566
        %v1567 = vunpack.c.h.b16 %v566
        %v1568 = vunpack.c.l.b16 %v567
        %v1569 = vunpack.c.h.b16 %v567
        %v1570 = vunpack.c.l.b16 %v568
        %v1571 = vunpack.c.h.b16 %v568
        %v1572 = vunpack.c.l.b16 %v569
        %v1573 = vunpack.c.h.b16 %v569
        %v1574 = vunpack.c.l.b16 %v570
        %v1575 = vunpack.c.h.b16 %v570
        %v1576 = vunpack.c.l.b16 %v571
        %v1577 = vunpack.c.h.b16 %v571
        %v1578 = vunpack.c.l.b16 %v572
        %v1579 = vunpack.c.h.b16 %v572
        %v1580 = vunpack.c.l.b16 %v573
        %v1581 = vunpack.c.h.b16 %v573
        %v1582 = vunpack.c.l.b16 %v574
        %v1583 = vunpack.c.h.b16 %v574
        %v1584 = vunpack.c.l.b16 %v575
        %v1585 = vunpack.c.h.b16 %v575
        %v1586 = vunpack.c.l.b16 %v576
        %v1587 = vunpack.c.h.b16 %v576
        %v1588 = vunpack.c.l.b16 %v577
        %v1589 = vunpack.c.h.b16 %v577
        %v1590 = vunpack.c.l.b16 %v578
        %v1591 = vunpack.c.h.b16 %v578
        %v1592 = vunpack.c.l.b16 %v579
        %v1593 = vunpack.c.h.b16 %v579
        %v1594 = vunpack.c.l.b16 %v580
        %v1595 = vunpack.c.h.b16 %v580
        %v1596 = vunpack.c.l.b16 %v581
        %v1597 = vunpack.c.h.b16 %v581
        %v1598 = vunpack.c.l.b16 %v582
        %v1599 = vunpack.c.h.b16 %v582
        %v1600 = vunpack.c.l.b16 %v583
        %v1601 = vunpack.c.h.b16 %v583
        %v1602 = vunpack.c.l.b16 %v584
        %v1603 = vunpack.c.h.b16 %v584
        %v1604 = vunpack.c.l.b16 %v585
        %v1605 = vunpack.c.h.b16 %v585
        %v1606 = vunpack.c.l.b16 %v586
        %v1607 = vunpack.c.h.b16 %v586
        %v1608 = vunpack.c.l.b16 %v587
        %v1609 = vunpack.c.h.b16 %v587
        %v1610 = vunpack.c.l.b16 %v588
        %v1611 = vunpack.c.h.b16 %v588
        %v1612 = vunpack.c.l.b16 %v589
        %v1613 = vunpack.c.h.b16 %v589
        %v1614 = vunpack.c.l.b16 %v590
        %v1615 = vunpack.c.h.b16 %v590
        %v1616 = vunpack.c.l.b16 %v591
        %v1617 = vunpack.c.h.b16 %v591
        %v1618 = vunpack.c.l.b16 %v592
        %v1619 = vunpack.c.h.b16 %v592
        %v1620 = vunpack.c.l.b16 %v593
        %v1621 = vunpack.c.h.b16 %v593
        %v1622 = vunpack.c.l.b16 %v594
        %v1623 = vunpack.c.h.b16 %v594
        %v1624 = vunpack.c.l.b16 %v595
        %v1625 = vunpack.c.h.b16 %v595
        %v1626 = vunpack.c.l.b16 %v596
        %v1627 = vunpack.c.h.b16 %v596
        %v1628 = vunpack.c.l.b16 %v597
        %v1629 = vunpack.c.h.b16 %v597
        %v1630 = vunpack.c.l.b16 %v598
        %v1631 = vunpack.c.h.b16 %v598
        %v1632 = vunpack.c.l.b16 %v599
        %v1633 = vunpack.c.h.b16 %v599
        %v1634 = vunpack.c.l.b16 %v600
        %v1635 = vunpack.c.h.b16 %v600
        %v1636 = vunpack.c.l.b16 %v601
        %v1637 = vunpack.c.h.b16 %v601
        %v1638 = vunpack.c.l.b16 %v602
        %v1639 = vunpack.c.h.b16 %v602
        %v1640 = vunpack.c.l.b16 %v603
        %v1641 = vunpack.c.h.b16 %v603
        %v1642 = vunpack.c.l.b16 %v604
        %v1643 = vunpack.c.h.b16 %v604
        %v1644 = vunpack.c.l.b16 %v605
        %v1645 = vunpack.c.h.b16 %v605
        %v1646 = vunpack.c.l.b16 %v606
        %v1647 = vunpack.c.h.b16 %v606
        %v1648 = vunpack.c.l.b16 %v607
        %v1649 = vunpack.c.h.b16 %v607
        %v1650 = vunpack.c.l.b16 %v608
        %v1651 = vunpack.c.h.b16 %v608
        %v1652 = vunpack.c.l.b16 %v609
        %v1653 = vunpack.c.h.b16 %v609
        %v1654 = vunpack.c.l.b16 %v610
        %v1655 = vunpack.c.h.b16 %v610
        %v1656 = vunpack.c.l.b16 %v611
        %v1657 = vunpack.c.h.b16 %v611
        %v1658 = vunpack.c.l.b16 %v612
        %v1659 = vunpack.c.h.b16 %v612
        %v1660 = vunpack.c.l.b16 %v613
        %v1661 = vunpack.c.h.b16 %v613
        %v1662 = vunpack.c.l.b16 %v614
        %v1663 = vunpack.c.h.b16 %v614
        %v1664 = vunpack.c.l.b16 %v615
        %v1665 = vunpack.c.h.b16 %v615
        %v1666 = vunpack.c.l.b16 %v616
        %v1667 = vunpack.c.h.b16 %v616
        %v1668 = vunpack.c.l.b16 %v617
        %v1669 = vunpack.c.h.b16 %v617
        %v1670 = vunpack.c.l.b16 %v618
        %v1671 = vunpack.c.h.b16 %v618
        %v1672 = vunpack.c.l.b16 %v619
        %v1673 = vunpack.c.h.b16 %v619
        %v1674 = vunpack.c.l.b16 %v620
        %v1675 = vunpack.c.h.b16 %v620
        %v1676 = vunpack.c.l.b16 %v621
        %v1677 = vunpack.c.h.b16 %v621
        %v1678 = vunpack.c.l.b16 %v622
        %v1679 = vunpack.c.h.b16 %v622
        %v1680 = vunpack.c.l.b16 %v623
        %v1681 = vunpack.c.h.b16 %v623
        %v1682 = vunpack.c.l.b16 %v624
        %v1683 = vunpack.c.h.b16 %v624
        %v1684 = vunpack.c.l.b16 %v625
        %v1685 = vunpack.c.h.b16 %v625
        %v1686 = vunpack.c.l.b16 %v626
        %v1687 = vunpack.c.h.b16 %v626
        %v1688 = vunpack.c.l.b16 %v627
        %v1689 = vunpack.c.h.b16 %v627
        %v1690 = vunpack.c.l.b16 %v628
        %v1691 = vunpack.c.h.b16 %v628
        %v1692 = vunpack.c.l.b16 %v629
        %v1693 = vunpack.c.h.b16 %v629
        %v1694 = vunpack.c.l.b16 %v630
        %v1695 = vunpack.c.h.b16 %v630
        %v1696 = vunpack.c.l.b16 %v631
        %v1697 = vunpack.c.h.b16 %v631
        %v1698 = vunpack.c.l.b16 %v632
        %v1699 = vunpack.c.h.b16 %v632
        %v1700 = vunpack.c.l.b16 %v633
        %v1701 = vunpack.c.h.b16 %v633
        %v1702 = vunpack.c.l.b16 %v634
        %v1703 = vunpack.c.h.b16 %v634
        %v1704 = vunpack.c.l.b16 %v635
        %v1705 = vunpack.c.h.b16 %v635
        %v1706 = vunpack.c.l.b16 %v636
        %v1707 = vunpack.c.h.b16 %v636
        %v1708 = vunpack.c.l.b16 %v637
        %v1709 = vunpack.c.h.b16 %v637
        %v1710 = vunpack.c.l.b16 %v638
        %v1711 = vunpack.c.h.b16 %v638
        %v1712 = vunpack.c.l.b16 %v639
        %v1713 = vunpack.c.h.b16 %v639
        %v1714 = vunpack.c.l.b16 %v640
        %v1715 = vunpack.c.h.b16 %v640
        %v1716 = vunpack.c.l.b16 %v641
        %v1717 = vunpack.c.h.b16 %v641
        %v1718 = vunpack.c.l.b16 %v642
        %v1719 = vunpack.c.h.b16 %v642
        %v1720 = vunpack.c.l.b16 %v643
        %v1721 = vunpack.c.h.b16 %v643
        %v1722 = vunpack.c.l.b16 %v644
        %v1723 = vunpack.c.h.b16 %v644
        %v1724 = vunpack.c.l.b16 %v645
        %v1725 = vunpack.c.h.b16 %v645
        %v1726 = vunpack.c.l.b16 %v646
        %v1727 = vunpack.c.h.b16 %v646
        %v1728 = vunpack.c.l.b16 %v647
        %v1729 = vunpack.c.h.b16 %v647
        %v1730 = vunpack.c.l.b16 %v648
        %v1731 = vunpack.c.h.b16 %v648
        %v1732 = vunpack.c.l.b16 %v649
        %v1733 = vunpack.c.h.b16 %v649
        %v1734 = vunpack.c.l.b16 %v650
        %v1735 = vunpack.c.h.b16 %v650
        %v1736 = vunpack.c.l.b16 %v651
        %v1737 = vunpack.c.h.b16 %v651
        %v1738 = vunpack.c.l.b16 %v652
        %v1739 = vunpack.c.h.b16 %v652
        %v1740 = vunpack.c.l.b16 %v653
        %v1741 = vunpack.c.h.b16 %v653
        %v1742 = vunpack.c.l.b16 %v654
        %v1743 = vunpack.c.h.b16 %v654
        %v1744 = vunpack.c.l.b16 %v655
        %v1745 = vunpack.c.h.b16 %v655
        %v1746 = vunpack.c.l.b16 %v656
        %v1747 = vunpack.c.h.b16 %v656
        %v1748 = vunpack.c.l.b16 %v657
        %v1749 = vunpack.c.h.b16 %v657
        %v1750 = vunpack.c.l.b16 %v658
        %v1751 = vunpack.c.h.b16 %v658
        %v1752 = vunpack.c.l.b16 %v659
        %v1753 = vunpack.c.h.b16 %v659
        %v1754 = vunpack.c.l.b16 %v660
        %v1755 = vunpack.c.h.b16 %v660
        %v1756 = vunpack.c.l.b16 %v661
        %v1757 = vunpack.c.h.b16 %v661
        %v1758 = vunpack.c.l.b16 %v662
        %v1759 = vunpack.c.h.b16 %v662
        %v1760 = vunpack.c.l.b16 %v663
        %v1761 = vunpack.c.h.b16 %v663
        %v1762 = vunpack.c.l.b16 %v664
        %v1763 = vunpack.c.h.b16 %v664
        %v1764 = vunpack.c.l.b16 %v665
        %v1765 = vunpack.c.h.b16 %v665
        %v1766 = vunpack.c.l.b16 %v666
        %v1767 = vunpack.c.h.b16 %v666
        %v1768 = vunpack.c.l.b16 %v667
        %v1769 = vunpack.c.h.b16 %v667
        %v1770 = vunpack.c.l.b16 %v668
        %v1771 = vunpack.c.h.b16 %v668
        %v1772 = vunpack.c.l.b16 %v669
        %v1773 = vunpack.c.h.b16 %v669
        %v1774 = vunpack.c.l.b16 %v670
        %v1775 = vunpack.c.h.b16 %v670
        %v1776 = vpack.c.b16 %v1138, %v1136
        %v1777 = vpack.c.b16 %v1139, %v1137
        %v1778 = vpack.c.b16 %v1142, %v1140
        %v1779 = vpack.c.b16 %v1143, %v1141
        %v1780 = vpack.c.b16 %v1146, %v1144
        %v1781 = vpack.c.b16 %v1147, %v1145
        %v1782 = vpack.c.b16 %v1150, %v1148
        %v1783 = vpack.c.b16 %v1151, %v1149
        %v1784 = vpack.c.b16 %v1154, %v1152
        %v1785 = vpack.c.b16 %v1155, %v1153
        %v1786 = vpack.c.b16 %v1158, %v1156
        %v1787 = vpack.c.b16 %v1159, %v1157
        %v1788 = vpack.c.b16 %v1162, %v1160
        %v1789 = vpack.c.b16 %v1163, %v1161
        %v1790 = vpack.c.b16 %v1166, %v1164
        %v1791 = vpack.c.b16 %v1167, %v1165
        %v1792 = vpack.c.b16 %v1170, %v1168
        %v1793 = vpack.c.b16 %v1171, %v1169
        %v1794 = vpack.c.b16 %v1174, %v1172
        %v1795 = vpack.c.b16 %v1175, %v1173
        %v1796 = vpack.c.b16 %v1178, %v1176
        %v1797 = vpack.c.b16 %v1179, %v1177
        %v1798 = vpack.c.b16 %v1182, %v1180
        %v1799 = vpack.c.b16 %v1183, %v1181
        %v1800 = vpack.c.b16 %v1186, %v1184
        %v1801 = vpack.c.b16 %v1187, %v1185
        %v1802 = vpack.c.b16 %v1190, %v1188
        %v1803 = vpack.c.b16 %v1191, %v1189
        %v1804 = vpack.c.b16 %v1194, %v1192
        %v1805 = vpack.c.b16 %v1195, %v1193
        %v1806 = vpack.c.b16 %v1198, %v1196
        %v1807 = vpack.c.b16 %v1199, %v1197
        %v1808 = vpack.c.b16 %v1202, %v1200
        %v1809 = vpack.c.b16 %v1203, %v1201
        %v1810 = vpack.c.b16 %v1206, %v1204
        %v1811 = vpack.c.b16 %v1207, %v1205
        %v1812 = vpack.c.b16 %v1210, %v1208
        %v1813 = vpack.c.b16 %v1211, %v1209
        %v1814 = vpack.c.b16 %v1214, %v1212
        %v1815 = vpack.c.b16 %v1215, %v1213
        %v1816 = vpack.c.b16 %v1218, %v1216
        %v1817 = vpack.c.b16 %v1219, %v1217
        %v1818 = vpack.c.b16 %v1222, %v1220
        %v1819 = vpack.c.b16 %v1223, %v1221
        %v1820 = vpack.c.b16 %v1226, %v1224
        %v1821 = vpack.c.b16 %v1227, %v1225
        %v1822 = vpack.c.b16 %v1230, %v1228
        %v1823 = vpack.c.b16 %v1231, %v1229
        %v1824 = vpack.c.b16 %v1234, %v1232
        %v1825 = vpack.c.b16 %v1235, %v1233
        %v1826 = vpack.c.b16 %v1238, %v1236
        %v1827 = vpack.c.b16 %v1239, %v1237
        %v1828 = vpack.c.b16 %v1242, %v1240
        %v1829 = vpack.c.b16 %v1243, %v1241
        %v1830 = vpack.c.b16 %v1246, %v1244
        %v1831 = vpack.c.b16 %v1247, %v1245
        %v1832 = vpack.c.b16 %v1250, %v1248
        %v1833 = vpack.c.b16 %v1251, %v1249
        %v1834 = vpack.c.b16 %v1254, %v1252
        %v1835 = vpack.c.b16 %v1255, %v1253
        %v1836 = vpack.c.b16 %v1258, %v1256
        %v1837 = vpack.c.b16 %v1259, %v1257
        %v1838 = vpack.c.b16 %v1262, %v1260
        %v1839 = vpack.c.b16 %v1263, %v1261
        %v1840 = vpack.c.b16 %v1266, %v1264
        %v1841 = vpack.c.b16 %v1267, %v1265
        %v1842 = vpack.c.b16 %v1270, %v1268
        %v1843 = vpack.c.b16 %v1271, %v1269
        %v1844 = vpack.c.b16 %v1274, %v1272
        %v1845 = vpack.c.b16 %v1275, %v1273
        %v1846 = vpack.c.b16 %v1278, %v1276
        %v1847 = vpack.c.b16 %v1279, %v1277
        %v1848 = vpack.c.b16 %v1282, %v1280
        %v1849 = vpack.c.b16 %v1283, %v1281
        %v1850 = vpack.c.b16 %v1286, %v1284
        %v1851 = vpack.c.b16 %v1287, %v1285
        %v1852 = vpack.c.b16 %v1290, %v1288
        %v1853 = vpack.c.b16 %v1291, %v1289
        %v1854 = vpack.c.b16 %v1294, %v1292
        %v1855 = vpack.c.b16 %v1295, %v1293
        %v1856 = vpack.c.b16 %v1298, %v1296
        %v1857 = vpack.c.b16 %v1299, %v1297
        %v1858 = vpack.c.b16 %v1302, %v1300
        %v1859 = vpack.c.b16 %v1303, %v1301
        %v1860 = vpack.c.b16 %v1306, %v1304
        %v1861 = vpack.c.b16 %v1307, %v1305
        %v1862 = vpack.c.b16 %v1310, %v1308
        %v1863 = vpack.c.b16 %v1311, %v1309
        %v1864 = vpack.c.b16 %v1314, %v1312
        %v1865 = vpack.c.b16 %v1315, %v1313
        %v1866 = vpack.c.b16 %v1318, %v1316
        %v1867 = vpack.c.b16 %v1319, %v1317
        %v1868 = vpack.c.b16 %v1322, %v1320
        %v1869 = vpack.c.b16 %v1323, %v1321
        %v1870 = vpack.c.b16 %v1326, %v1324
        %v1871 = vpack.c.b16 %v1327, %v1325
        %v1872 = vpack.c.b16 %v1330, %v1328
        %v1873 = vpack.c.b16 %v1331, %v1329
        %v1874 = vpack.c.b16 %v1334, %v1332
        %v1875 = vpack.c.b16 %v1335, %v1333
        %v1876 = vpack.c.b16 %v1338, %v1336
        %v1877 = vpack.c.b16 %v1339, %v1337
        %v1878 = vpack.c.b16 %v1342, %v1340
        %v1879 = vpack.c.b16 %v1343, %v1341
        %v1880 = vpack.c.b16 %v1346, %v1344
        %v1881 = vpack.c.b16 %v1347, %v1345
        %v1882 = vpack.c.b16 %v1350, %v1348
        %v1883 = vpack.c.b16 %v1351, %v1349
        %v1884 = vpack.c.b16 %v1354, %v1352
        %v1885 = vpack.c.b16 %v1355, %v1353
        %v1886 = vpack.c.b16 %v1358, %v1356
        %v1887 = vpack.c.b16 %v1359, %v1357
        %v1888 = vpack.c.b16 %v1362, %v1360
        %v1889 = vpack.c.b16 %v1363, %v1361
        %v1890 = vpack.c.b16 %v1366, %v1364
        %v1891 = vpack.c.b16 %v1367, %v1365
        %v1892 = vpack.c.b16 %v1370, %v1368
        %v1893 = vpack.c.b16 %v1371, %v1369
        %v1894 = vpack.c.b16 %v1374, %v1372
        %v1895 = vpack.c.b16 %v1375, %v1373
        %v1896 = vpack.c.b16 %v1378, %v1376
        %v1897 = vpack.c.b16 %v1379, %v1377
        %v1898 = vpack.c.b16 %v1382, %v1380
        %v1899 = vpack.c.b16 %v1383, %v1381
        %v1900 = vpack.c.b16 %v1386, %v1384
        %v1901 = vpack.c.b16 %v1387, %v1385
        %v1902 = vpack.c.b16 %v1390, %v1388
        %v1903 = vpack.c.b16 %v1391, %v1389
        %v1904 = vpack.c.b16 %v1394, %v1392
        %v1905 = vpack.c.b16 %v1395, %v1393
        %v1906 = vpack.c.b16 %v1398, %v1396
        %v1907 = vpack.c.b16 %v1399, %v1397
        %v1908 = vpack.c.b16 %v1402, %v1400
        %v1909 = vpack.c.b16 %v1403, %v1401
        %v1910 = vpack.c.b16 %v1406, %v1404
        %v1911 = vpack.c.b16 %v1407, %v1405
        %v1912 = vpack.c.b16 %v1410, %v1408
        %v1913 = vpack.c.b16 %v1411, %v1409
        %v1914 = vpack.c.b16 %v1414, %v1412
        %v1915 = vpack.c.b16 %v1415, %v1413
        %v1916 = vpack.c.b16 %v1418, %v1416
        %v1917 = vpack.c.b16 %v1419, %v1417
        %v1918 = vpack.c.b16 %v1422, %v1420
        %v1919 = vpack.c.b16 %v1423, %v1421
        %v1920 = vpack.c.b16 %v1426, %v1424
        %v1921 = vpack.c.b16 %v1427, %v1425
        %v1922 = vpack.c.b16 %v1430, %v1428
        %v1923 = vpack.c.b16 %v1431, %v1429
        %v1924 = vpack.c.b16 %v1434, %v1432
        %v1925 = vpack.c.b16 %v1435, %v1433
        %v1926 = vpack.c.b16 %v1438, %v1436
        %v1927 = vpack.c.b16 %v1439, %v1437
        %v1928 = vpack.c.b16 %v1442, %v1440
        %v1929 = vpack.c.b16 %v1443, %v1441
        %v1930 = vpack.c.b16 %v1446, %v1444
        %v1931 = vpack.c.b16 %v1447, %v1445
        %v1932 = vpack.c.b16 %v1450, %v1448
        %v1933 = vpack.c.b16 %v1451, %v1449
        %v1934 = vpack.c.b16 %v1454, %v1452
        %v1935 = vpack.c.b16 %v1455, %v1453
        %v1936 = vpack.c.b16 %v1458, %v1456
        %v1937 = vpack.c.b16 %v1459, %v1457
        %v1938 = vpack.c.b16 %v1462, %v1460
        %v1939 = vpack.c.b16 %v1463, %v1461
        %v1940 = vpack.c.b16 %v1466, %v1464
        %v1941 = vpack.c.b16 %v1467, %v1465
        %v1942 = vpack.c.b16 %v1470, %v1468
        %v1943 = vpack.c.b16 %v1471, %v1469
        %v1944 = vpack.c.b16 %v1474, %v1472
        %v1945 = vpack.c.b16 %v1475, %v1473
        %v1946 = vpack.c.b16 %v1478, %v1476
        %v1947 = vpack.c.b16 %v1479, %v1477
        %v1948 = vpack.c.b16 %v1482, %v1480
        %v1949 = vpack.c.b16 %v1483, %v1481
        %v1950 = vpack.c.b16 %v1486, %v1484
        %v1951 = vpack.c.b16 %v1487, %v1485
        %v1952 = vpack.c.b16 %v1490, %v1488
        %v1953 = vpack.c.b16 %v1491, %v1489
        %v1954 = vpack.c.b16 %v1494, %v1492
        %v1955 = vpack.c.b16 %v1495, %v1493
        %v1956 = vpack.c.b16 %v1498, %v1496
        %v1957 = vpack.c.b16 %v1499, %v1497
        %v1958 = vpack.c.b16 %v1502, %v1500
        %v1959 = vpack.c.b16 %v1503, %v1501
        %v1960 = vpack.c.b16 %v1506, %v1504
        %v1961 = vpack.c.b16 %v1507, %v1505
        %v1962 = vpack.c.b16 %v1510, %v1508
        %v1963 = vpack.c.b16 %v1511, %v1509
        %v1964 = vpack.c.b16 %v1514, %v1512
        %v1965 = vpack.c.b16 %v1515, %v1513
        %v1966 = vpack.c.b16 %v1518, %v1516
        %v1967 = vpack.c.b16 %v1519, %v1517
        %v1968 = vpack.c.b16 %v1522, %v1520
        %v1969 = vpack.c.b16 %v1523, %v1521
        %v1970 = vpack.c.b16 %v1526, %v1524
        %v1971 = vpack.c.b16 %v1527, %v1525
        %v1972 = vpack.c.b16 %v1530, %v1528
        %v1973 = vpack.c.b16 %v1531, %v1529
        %v1974 = vpack.c.b16 %v1534, %v1532
        %v1975 = vpack.c.b16 %v1535, %v1533
        %v1976 = vpack.c.b16 %v1538, %v1536
        %v1977 = vpack.c.b16 %v1539, %v1537
        %v1978 = vpack.c.b16 %v1542, %v1540
        %v1979 = vpack.c.b16 %v1543, %v1541
        %v1980 = vpack.c.b16 %v1546, %v1544
        %v1981 = vpack.c.b16 %v1547, %v1545
        %v1982 = vpack.c.b16 %v1550, %v1548
        %v1983 = vpack.c.b16 %v1551, %v1549
        %v1984 = vpack.c.b16 %v1554, %v1552
        %v1985 = vpack.c.b16 %v1555, %v1553
        %v1986 = vpack.c.b16 %v1558, %v1556
        %v1987 = vpack.c.b16 %v1559, %v1557
        %v1988 = vpack.c.b16 %v1562, %v1560
        %v1989 = vpack.c.b16 %v1563, %v1561
        %v1990 = vpack.c.b16 %v1566, %v1564
        %v1991 = vpack.c.b16 %v1567, %v1565
        %v1992 = vpack.c.b16 %v1570, %v1568
        %v1993 = vpack.c.b16 %v1571, %v1569
        %v1994 = vpack.c.b16 %v1574, %v1572
        %v1995 = vpack.c.b16 %v1575, %v1573
        %v1996 = vpack.c.b16 %v1578, %v1576
        %v1997 = vpack.c.b16 %v1579, %v1577
        %v1998 = vpack.c.b16 %v1582, %v1580
        %v1999 = vpack.c.b16 %v1583, %v1581
        %v2000 = vpack.c.b16 %v1586, %v1584
        %v2001 = vpack.c.b16 %v1587, %v1585
        %v2002 = vpack.c.b16 %v1590, %v1588
        %v2003 = vpack.c.b16 %v1591, %v1589
        %v2004 = vpack.c.b16 %v1594, %v1592
        %v2005 = vpack.c.b16 %v1595, %v1593
        %v2006 = vpack.c.b16 %v1598, %v1596
        %v2007 = vpack.c.b16 %v1599, %v1597
        %v2008 = vpack.c.b16 %v1602, %v1600
        %v2009 = vpack.c.b16 %v1603, %v1601
        %v2010 = vpack.c.b16 %v1606, %v1604
        %v2011 = vpack.c.b16 %v1607, %v1605
        %v2012 = vpack.c.b16 %v1610, %v1608
        %v2013 = vpack.c.b16 %v1611, %v1609
        %v2014 = vpack.c.b16 %v1614, %v1612
        %v2015 = vpack.c.b16 %v1615, %v1613
        %v2016 = vpack.c.b16 %v1618, %v1616
        %v2017 = vpack.c.b16 %v1619, %v1617
        %v2018 = vpack.c.b16 %v1622, %v1620
        %v2019 = vpack.c.b16 %v1623, %v1621
        %v2020 = vpack.c.b16 %v1626, %v1624
        %v2021 = vpack.c.b16 %v1627, %v1625
        %v2022 = vpack.c.b16 %v1630, %v1628
        %v2023 = vpack.c.b16 %v1631, %v1629
        %v2024 = vpack.c.b16 %v1634, %v1632
        %v2025 = vpack.c.b16 %v1635, %v1633
        %v2026 = vpack.c.b16 %v1638, %v1636
        %v2027 = vpack.c.b16 %v1639, %v1637
        %v2028 = vpack.c.b16 %v1642, %v1640
        %v2029 = vpack.c.b16 %v1643, %v1641
        %v2030 = vpack.c.b16 %v1646, %v1644
        %v2031 = vpack.c.b16 %v1647, %v1645
        %v2032 = vpack.c.b16 %v1650, %v1648
        %v2033 = vpack.c.b16 %v1651, %v1649
        %v2034 = vpack.c.b16 %v1654, %v1652
        %v2035 = vpack.c.b16 %v1655, %v1653
        %v2036 = vpack.c.b16 %v1658, %v1656
        %v2037 = vpack.c.b16 %v1659, %v1657
        %v2038 = vpack.c.b16 %v1662, %v1660
        %v2039 = vpack.c.b16 %v1663, %v1661
        %v2040 = vpack.c.b16 %v1666, %v1664
        %v2041 = vpack.c.b16 %v1667, %v1665
        %v2042 = vpack.c.b16 %v1670, %v1668
        %v2043 = vpack.c.b16 %v1671, %v1669
        %v2044 = vpack.c.b16 %v1674, %v1672
        %v2045 = vpack.c.b16 %v1675, %v1673
        %v2046 = vpack.c.b16 %v1678, %v1676
        %v2047 = vpack.c.b16 %v1679, %v1677
        %v2048 = vpack.c.b16 %v1682, %v1680
        %v2049 = vpack.c.b16 %v1683, %v1681
        %v2050 = vpack.c.b16 %v1686, %v1684
        %v2051 = vpack.c.b16 %v1687, %v1685
        %v2052 = vpack.c.b16 %v1690, %v1688
        %v2053 = vpack.c.b16 %v1691, %v1689
        %v2054 = vpack.c.b16 %v1694, %v1692
        %v2055 = vpack.c.b16 %v1695, %v1693
        %v2056 = vpack.c.b16 %v1698, %v1696
        %v2057 = vpack.c.b16 %v1699, %v1697
        %v2058 = vpack.c.b16 %v1702, %v1700
        %v2059 = vpack.c.b16 %v1703, %v1701
        %v2060 = vpack.c.b16 %v1706, %v1704
        %v2061 = vpack.c.b16 %v1707, %v1705
        %v2062 = vpack.c.b16 %v1710, %v1708
        %v2063 = vpack.c.b16 %v1711, %v1709
        %v2064 = vpack.c.b16 %v1714, %v1712
        %v2065 = vpack.c.b16 %v1715, %v1713
        %v2066 = vpack.c.b16 %v1718, %v1716
        %v2067 = vpack.c.b16 %v1719, %v1717
        %v2068 = vpack.c.b16 %v1722, %v1720
        %v2069 = vpack.c.b16 %v1723, %v1721
        %v2070 = vpack.c.b16 %v1726, %v1724
        %v2071 = vpack.c.b16 %v1727, %v1725
        %v2072 = vpack.c.b16 %v1730, %v1728
        %v2073 = vpack.c.b16 %v1731, %v1729
        %v2074 = vpack.c.b16 %v1734, %v1732
        %v2075 = vpack.c.b16 %v1735, %v1733
        %v2076 = vpack.c.b16 %v1738, %v1736
        %v2077 = vpack.c.b16 %v1739, %v1737
        %v2078 = vpack.c.b16 %v1742, %v1740
        %v2079 = vpack.c.b16 %v1743, %v1741
        %v2080 = vpack.c.b16 %v1746, %v1744
        %v2081 = vpack.c.b16 %v1747, %v1745
        %v2082 = vpack.c.b16 %v1750, %v1748
        %v2083 = vpack.c.b16 %v1751, %v1749
        %v2084 = vpack.c.b16 %v1754, %v1752
        %v2085 = vpack.c.b16 %v1755, %v1753
        %v2086 = vpack.c.b16 %v1758, %v1756
        %v2087 = vpack.c.b16 %v1759, %v1757
        %v2088 = vpack.c.b16 %v1762, %v1760
        %v2089 = vpack.c.b16 %v1763, %v1761
        %v2090 = vpack.c.b16 %v1766, %v1764
        %v2091 = vpack.c.b16 %v1767, %v1765
        %v2092 = vpack.c.b16 %v1770, %v1768
        %v2093 = vpack.c.b16 %v1771, %v1769
        %v2094 = vpack.c.b16 %v1774, %v1772
        %v2095 = vpack.c.b16 %v1775, %v1773
        %2416 = vmatprep.subr.bf16.mxu0 %v1777
        %2417 = vmatpush1.bf16.msra.mxu0 %v1776
        %2418 = vmatprep.subr.bf16.mxu0 %v1779
        %2419 = vmatpush1.bf16.msra.mxu0 %v1778
        %2420 = vmatprep.subr.bf16.mxu0 %v1781
        %2421 = vmatpush1.bf16.msra.mxu0 %v1780
        %2422 = vmatprep.subr.bf16.mxu0 %v1783
        %2423 = vmatpush1.bf16.msra.mxu0 %v1782
        %2424 = vmatprep.subr.bf16.mxu0 %v1785
        %2425 = vmatpush1.bf16.msra.mxu0 %v1784
        %2426 = vmatprep.subr.bf16.mxu0 %v1787
        %2427 = vmatpush1.bf16.msra.mxu0 %v1786
        %2428 = vmatprep.subr.bf16.mxu0 %v1789
        %2429 = vmatpush1.bf16.msra.mxu0 %v1788
        %2430 = vmatprep.subr.bf16.mxu0 %v1791
        %2431 = vmatpush1.bf16.msra.mxu0 %v1790
        %2432 = vmatprep.subr.bf16.mxu0 %v1793
        %2433 = vmatpush1.bf16.msra.mxu0 %v1792
        %2434 = vmatprep.subr.bf16.mxu0 %v1795
        %2435 = vmatpush1.bf16.msra.mxu0 %v1794
        %2436 = vmatprep.subr.bf16.mxu0 %v1797
        %2437 = vmatpush1.bf16.msra.mxu0 %v1796
        %2438 = vmatprep.subr.bf16.mxu0 %v1799
        %2439 = vmatpush1.bf16.msra.mxu0 %v1798
        %2440 = vmatprep.subr.bf16.mxu0 %v1801
        %2441 = vmatpush1.bf16.msra.mxu0 %v1800
        %2442 = vmatprep.subr.bf16.mxu0 %v1803
        %2443 = vmatpush1.bf16.msra.mxu0 %v1802
        %2444 = vmatprep.subr.bf16.mxu0 %v1805
        %2445 = vmatpush1.bf16.msra.mxu0 %v1804
        %2446 = vmatprep.subr.bf16.mxu0 %v1807
        %2447 = vmatpush1.bf16.msra.mxu0 %v1806
        %2448 = vmatprep.mubr.bf16.mxu0 %v711
        %2449 = vmatmul.mubr.bf16.gmra.mrb[0].mxu0 %v697
        %v2450 = vpop.f32.mrb[0].mxu0
        %v2451 = vadd.f32 0.0, %v2450
        %v2452 = vpop.f32.mrb[0].mxu0
        %v2453 = vadd.f32 0.0, %v2452
        %v2454 = vpop.f32.mrb[0].mxu0
        %v2455 = vpop.f32.mrb[0].mxu0
        %2456 = vdwg.mxu0
        %2457 = vmatprep.subr.bf16.mxu0 %v1809
        %2458 = vmatpush1.bf16.msra.mxu0 %v1808
        %2459 = vmatprep.subr.bf16.mxu0 %v1811
        %2460 = vmatpush1.bf16.msra.mxu0 %v1810
        %2461 = vmatprep.subr.bf16.mxu0 %v1813
        %2462 = vmatpush1.bf16.msra.mxu0 %v1812
        %2463 = vmatprep.subr.bf16.mxu0 %v1815
        %2464 = vmatpush1.bf16.msra.mxu0 %v1814
        %2465 = vmatprep.subr.bf16.mxu0 %v1817
        %2466 = vmatpush1.bf16.msra.mxu0 %v1816
        %2467 = vmatprep.subr.bf16.mxu0 %v1819
        %2468 = vmatpush1.bf16.msra.mxu0 %v1818
        %2469 = vmatprep.subr.bf16.mxu0 %v1821
        %2470 = vmatpush1.bf16.msra.mxu0 %v1820
        %2471 = vmatprep.subr.bf16.mxu0 %v1823
        %2472 = vmatpush1.bf16.msra.mxu0 %v1822
        %2473 = vmatprep.subr.bf16.mxu0 %v1825
        %2474 = vmatpush1.bf16.msra.mxu0 %v1824
        %2475 = vmatprep.subr.bf16.mxu0 %v1827
        %2476 = vmatpush1.bf16.msra.mxu0 %v1826
        %2477 = vmatprep.subr.bf16.mxu0 %v1829
        %2478 = vmatpush1.bf16.msra.mxu0 %v1828
        %2479 = vmatprep.subr.bf16.mxu0 %v1831
        %2480 = vmatpush1.bf16.msra.mxu0 %v1830
        %2481 = vmatprep.subr.bf16.mxu0 %v1833
        %2482 = vmatpush1.bf16.msra.mxu0 %v1832
        %2483 = vmatprep.subr.bf16.mxu0 %v1835
        %2484 = vmatpush1.bf16.msra.mxu0 %v1834
        %2485 = vmatprep.subr.bf16.mxu0 %v1837
        %2486 = vmatpush1.bf16.msra.mxu0 %v1836
        %2487 = vmatprep.subr.bf16.mxu0 %v1839
        %2488 = vmatpush1.bf16.msra.mxu0 %v1838
        %2489 = vmatprep.mubr.bf16.mxu0 %v721
        %2490 = vmatmul.mubr.bf16.gmra.mrb[0].mxu0 %v719
        %v2491 = vpop.f32.mrb[0].mxu0
        %v2492 = vadd.f32 %v2451, %v2491
        %v2493 = vpop.f32.mrb[0].mxu0
        %v2494 = vadd.f32 %v2453, %v2493
        %v2495 = vpop.f32.mrb[0].mxu0
        %v2496 = vpop.f32.mrb[0].mxu0
        %2497 = vdwg.mxu0
        %2498 = vmatprep.subr.bf16.mxu0 %v1841
        %2499 = vmatpush1.bf16.msra.mxu0 %v1840
        %2500 = vmatprep.subr.bf16.mxu0 %v1843
        %2501 = vmatpush1.bf16.msra.mxu0 %v1842
        %2502 = vmatprep.subr.bf16.mxu0 %v1845
        %2503 = vmatpush1.bf16.msra.mxu0 %v1844
        %2504 = vmatprep.subr.bf16.mxu0 %v1847
        %2505 = vmatpush1.bf16.msra.mxu0 %v1846
        %2506 = vmatprep.subr.bf16.mxu0 %v1849
        %2507 = vmatpush1.bf16.msra.mxu0 %v1848
        %2508 = vmatprep.subr.bf16.mxu0 %v1851
        %2509 = vmatpush1.bf16.msra.mxu0 %v1850
        %2510 = vmatprep.subr.bf16.mxu0 %v1853
        %2511 = vmatpush1.bf16.msra.mxu0 %v1852
        %2512 = vmatprep.subr.bf16.mxu0 %v1855
        %2513 = vmatpush1.bf16.msra.mxu0 %v1854
        %2514 = vmatprep.subr.bf16.mxu0 %v1857
        %2515 = vmatpush1.bf16.msra.mxu0 %v1856
        %2516 = vmatprep.subr.bf16.mxu0 %v1859
        %2517 = vmatpush1.bf16.msra.mxu0 %v1858
        %2518 = vmatprep.subr.bf16.mxu0 %v1861
        %2519 = vmatpush1.bf16.msra.mxu0 %v1860
        %2520 = vmatprep.subr.bf16.mxu0 %v1863
        %2521 = vmatpush1.bf16.msra.mxu0 %v1862
        %2522 = vmatprep.subr.bf16.mxu0 %v1865
        %2523 = vmatpush1.bf16.msra.mxu0 %v1864
        %2524 = vmatprep.subr.bf16.mxu0 %v1867
        %2525 = vmatpush1.bf16.msra.mxu0 %v1866
        %2526 = vmatprep.subr.bf16.mxu0 %v1869
        %2527 = vmatpush1.bf16.msra.mxu0 %v1868
        %2528 = vmatprep.subr.bf16.mxu0 %v1871
        %2529 = vmatpush1.bf16.msra.mxu0 %v1870
        %2530 = vmatprep.mubr.bf16.mxu0 %v718
        %2531 = vmatmul.mubr.bf16.gmra.mrb[0].mxu0 %v704
        %v2532 = vpop.f32.mrb[0].mxu0
        %v2533 = vadd.f32 %v2492, %v2532
        %v2534 = vpop.f32.mrb[0].mxu0
        %v2535 = vadd.f32 %v2494, %v2534
        %v2536 = vpop.f32.mrb[0].mxu0
        %v2537 = vpop.f32.mrb[0].mxu0
        %2538 = vdwg.mxu0
        %2539 = vmatprep.subr.bf16.mxu0 %v1873
        %2540 = vmatpush1.bf16.msra.mxu0 %v1872
        %2541 = vmatprep.subr.bf16.mxu0 %v1875
        %2542 = vmatpush1.bf16.msra.mxu0 %v1874
        %2543 = vmatprep.subr.bf16.mxu0 %v1877
        %2544 = vmatpush1.bf16.msra.mxu0 %v1876
        %2545 = vmatprep.subr.bf16.mxu0 %v1879
        %2546 = vmatpush1.bf16.msra.mxu0 %v1878
        %2547 = vmatprep.subr.bf16.mxu0 %v1881
        %2548 = vmatpush1.bf16.msra.mxu0 %v1880
        %2549 = vmatprep.subr.bf16.mxu0 %v1883
        %2550 = vmatpush1.bf16.msra.mxu0 %v1882
        %2551 = vmatprep.subr.bf16.mxu0 %v1885
        %2552 = vmatpush1.bf16.msra.mxu0 %v1884
        %2553 = vmatprep.subr.bf16.mxu0 %v1887
        %2554 = vmatpush1.bf16.msra.mxu0 %v1886
        %2555 = vmatprep.subr.bf16.mxu0 %v1889
        %2556 = vmatpush1.bf16.msra.mxu0 %v1888
        %2557 = vmatprep.subr.bf16.mxu0 %v1891
        %2558 = vmatpush1.bf16.msra.mxu0 %v1890
        %2559 = vmatprep.subr.bf16.mxu0 %v1893
        %2560 = vmatpush1.bf16.msra.mxu0 %v1892
        %2561 = vmatprep.subr.bf16.mxu0 %v1895
        %2562 = vmatpush1.bf16.msra.mxu0 %v1894
        %2563 = vmatprep.subr.bf16.mxu0 %v1897
        %2564 = vmatpush1.bf16.msra.mxu0 %v1896
        %2565 = vmatprep.subr.bf16.mxu0 %v1899
        %2566 = vmatpush1.bf16.msra.mxu0 %v1898
        %2567 = vmatprep.subr.bf16.mxu0 %v1901
        %2568 = vmatpush1.bf16.msra.mxu0 %v1900
        %2569 = vmatprep.subr.bf16.mxu0 %v1903
        %2570 = vmatpush1.bf16.msra.mxu0 %v1902
        %2571 = vmatprep.mubr.bf16.mxu0 %v722
        %2572 = vmatmul.mubr.bf16.gmra.mrb[0].mxu0 %v720
        %v2573 = vpop.f32.mrb[0].mxu0
        %v2574 = vadd.f32 %v2533, %v2573
        %v2575 = vpop.f32.mrb[0].mxu0
        %v2576 = vadd.f32 %v2535, %v2575
        %v2577 = vpop.f32.mrb[0].mxu0
        %v2578 = vpop.f32.mrb[0].mxu0
        %2579 = vdwg.mxu0
        %2580 = vmatprep.subr.bf16.mxu0 %v1905
        %2581 = vmatpush1.bf16.msra.mxu0 %v1904
        %2582 = vmatprep.subr.bf16.mxu0 %v1907
        %2583 = vmatpush1.bf16.msra.mxu0 %v1906
        %2584 = vmatprep.subr.bf16.mxu0 %v1909
        %2585 = vmatpush1.bf16.msra.mxu0 %v1908
        %2586 = vmatprep.subr.bf16.mxu0 %v1911
        %2587 = vmatpush1.bf16.msra.mxu0 %v1910
        %2588 = vmatprep.subr.bf16.mxu0 %v1913
        %2589 = vmatpush1.bf16.msra.mxu0 %v1912
        %2590 = vmatprep.subr.bf16.mxu0 %v1915
        %2591 = vmatpush1.bf16.msra.mxu0 %v1914
        %2592 = vmatprep.subr.bf16.mxu0 %v1917
        %2593 = vmatpush1.bf16.msra.mxu0 %v1916
        %2594 = vmatprep.subr.bf16.mxu0 %v1919
        %2595 = vmatpush1.bf16.msra.mxu0 %v1918
        %2596 = vmatprep.subr.bf16.mxu0 %v1921
        %2597 = vmatpush1.bf16.msra.mxu0 %v1920
        %2598 = vmatprep.subr.bf16.mxu0 %v1923
        %2599 = vmatpush1.bf16.msra.mxu0 %v1922
        %2600 = vmatprep.subr.bf16.mxu0 %v1925
        %2601 = vmatpush1.bf16.msra.mxu0 %v1924
        %2602 = vmatprep.subr.bf16.mxu0 %v1927
        %2603 = vmatpush1.bf16.msra.mxu0 %v1926
        %2604 = vmatprep.subr.bf16.mxu0 %v1929
        %2605 = vmatpush1.bf16.msra.mxu0 %v1928
        %2606 = vmatprep.subr.bf16.mxu0 %v1931
        %2607 = vmatpush1.bf16.msra.mxu0 %v1930
        %2608 = vmatprep.subr.bf16.mxu0 %v1933
        %2609 = vmatpush1.bf16.msra.mxu0 %v1932
        %2610 = vmatprep.subr.bf16.mxu0 %v1935
        %2611 = vmatpush1.bf16.msra.mxu0 %v1934
        %2612 = vmatprep.mubr.bf16.mxu0 %v760
        %2613 = vmatmul.mubr.bf16.gmra.mrb[0].mxu0 %v746
        %v2614 = vpop.f32.mrb[0].mxu0
        %v2615 = vadd.f32 %v2574, %v2614
        %v2616 = vpop.f32.mrb[0].mxu0
        %v2617 = vadd.f32 %v2576, %v2616
        %v2618 = vpop.f32.mrb[0].mxu0
        %v2619 = vpop.f32.mrb[0].mxu0
        %2620 = vdwg.mxu0
        %2621 = vmatprep.subr.bf16.mxu0 %v1937
        %2622 = vmatpush1.bf16.msra.mxu0 %v1936
        %2623 = vmatprep.subr.bf16.mxu0 %v1939
        %2624 = vmatpush1.bf16.msra.mxu0 %v1938
        %2625 = vmatprep.subr.bf16.mxu0 %v1941
        %2626 = vmatpush1.bf16.msra.mxu0 %v1940
        %2627 = vmatprep.subr.bf16.mxu0 %v1943
        %2628 = vmatpush1.bf16.msra.mxu0 %v1942
        %2629 = vmatprep.subr.bf16.mxu0 %v1945
        %2630 = vmatpush1.bf16.msra.mxu0 %v1944
        %2631 = vmatprep.subr.bf16.mxu0 %v1947
        %2632 = vmatpush1.bf16.msra.mxu0 %v1946
        %2633 = vmatprep.subr.bf16.mxu0 %v1949
        %2634 = vmatpush1.bf16.msra.mxu0 %v1948
        %2635 = vmatprep.subr.bf16.mxu0 %v1951
        %2636 = vmatpush1.bf16.msra.mxu0 %v1950
        %2637 = vmatprep.subr.bf16.mxu0 %v1953
        %2638 = vmatpush1.bf16.msra.mxu0 %v1952
        %2639 = vmatprep.subr.bf16.mxu0 %v1955
        %2640 = vmatpush1.bf16.msra.mxu0 %v1954
        %2641 = vmatprep.subr.bf16.mxu0 %v1957
        %2642 = vmatpush1.bf16.msra.mxu0 %v1956
        %2643 = vmatprep.subr.bf16.mxu0 %v1959
        %2644 = vmatpush1.bf16.msra.mxu0 %v1958
        %2645 = vmatprep.subr.bf16.mxu0 %v1961
        %2646 = vmatpush1.bf16.msra.mxu0 %v1960
        %2647 = vmatprep.subr.bf16.mxu0 %v1963
        %2648 = vmatpush1.bf16.msra.mxu0 %v1962
        %2649 = vmatprep.subr.bf16.mxu0 %v1965
        %2650 = vmatpush1.bf16.msra.mxu0 %v1964
        %2651 = vmatprep.subr.bf16.mxu0 %v1967
        %2652 = vmatpush1.bf16.msra.mxu0 %v1966
        %2653 = vmatprep.mubr.bf16.mxu0 %v770
        %2654 = vmatmul.mubr.bf16.gmra.mrb[0].mxu0 %v768
        %v2655 = vpop.f32.mrb[0].mxu0
        %v2656 = vadd.f32 %v2615, %v2655
        %v2657 = vpop.f32.mrb[0].mxu0
        %v2658 = vadd.f32 %v2617, %v2657
        %v2659 = vpop.f32.mrb[0].mxu0
        %v2660 = vpop.f32.mrb[0].mxu0
        %2661 = vdwg.mxu0
        %2662 = vmatprep.subr.bf16.mxu0 %v1969
        %2663 = vmatpush1.bf16.msra.mxu0 %v1968
        %2664 = vmatprep.subr.bf16.mxu0 %v1971
        %2665 = vmatpush1.bf16.msra.mxu0 %v1970
        %2666 = vmatprep.subr.bf16.mxu0 %v1973
        %2667 = vmatpush1.bf16.msra.mxu0 %v1972
        %2668 = vmatprep.subr.bf16.mxu0 %v1975
        %2669 = vmatpush1.bf16.msra.mxu0 %v1974
        %2670 = vmatprep.subr.bf16.mxu0 %v1977
        %2671 = vmatpush1.bf16.msra.mxu0 %v1976
        %2672 = vmatprep.subr.bf16.mxu0 %v1979
        %2673 = vmatpush1.bf16.msra.mxu0 %v1978
        %2674 = vmatprep.subr.bf16.mxu0 %v1981
        %2675 = vmatpush1.bf16.msra.mxu0 %v1980
        %2676 = vmatprep.subr.bf16.mxu0 %v1983
        %2677 = vmatpush1.bf16.msra.mxu0 %v1982
        %2678 = vmatprep.subr.bf16.mxu0 %v1985
        %2679 = vmatpush1.bf16.msra.mxu0 %v1984
        %2680 = vmatprep.subr.bf16.mxu0 %v1987
        %2681 = vmatpush1.bf16.msra.mxu0 %v1986
        %2682 = vmatprep.subr.bf16.mxu0 %v1989
        %2683 = vmatpush1.bf16.msra.mxu0 %v1988
        %2684 = vmatprep.subr.bf16.mxu0 %v1991
        %2685 = vmatpush1.bf16.msra.mxu0 %v1990
        %2686 = vmatprep.subr.bf16.mxu0 %v1993
        %2687 = vmatpush1.bf16.msra.mxu0 %v1992
        %2688 = vmatprep.subr.bf16.mxu0 %v1995
        %2689 = vmatpush1.bf16.msra.mxu0 %v1994
        %2690 = vmatprep.subr.bf16.mxu0 %v1997
        %2691 = vmatpush1.bf16.msra.mxu0 %v1996
        %2692 = vmatprep.subr.bf16.mxu0 %v1999
        %2693 = vmatpush1.bf16.msra.mxu0 %v1998
        %2694 = vmatprep.mubr.bf16.mxu0 %v767
        %2695 = vmatmul.mubr.bf16.gmra.mrb[0].mxu0 %v753
        %v2696 = vpop.f32.mrb[0].mxu0
        %v2697 = vadd.f32 %v2656, %v2696
        %v2698 = vpop.f32.mrb[0].mxu0
        %v2699 = vadd.f32 %v2658, %v2698
        %v2700 = vpop.f32.mrb[0].mxu0
        %v2701 = vpop.f32.mrb[0].mxu0
        %2702 = vdwg.mxu0
        %2703 = vmatprep.subr.bf16.mxu0 %v2001
        %2704 = vmatpush1.bf16.msra.mxu0 %v2000
        %2705 = vmatprep.subr.bf16.mxu0 %v2003
        %2706 = vmatpush1.bf16.msra.mxu0 %v2002
        %2707 = vmatprep.subr.bf16.mxu0 %v2005
        %2708 = vmatpush1.bf16.msra.mxu0 %v2004
        %2709 = vmatprep.subr.bf16.mxu0 %v2007
        %2710 = vmatpush1.bf16.msra.mxu0 %v2006
        %2711 = vmatprep.subr.bf16.mxu0 %v2009
        %2712 = vmatpush1.bf16.msra.mxu0 %v2008
        %2713 = vmatprep.subr.bf16.mxu0 %v2011
        %2714 = vmatpush1.bf16.msra.mxu0 %v2010
        %2715 = vmatprep.subr.bf16.mxu0 %v2013
        %2716 = vmatpush1.bf16.msra.mxu0 %v2012
        %2717 = vmatprep.subr.bf16.mxu0 %v2015
        %2718 = vmatpush1.bf16.msra.mxu0 %v2014
        %2719 = vmatprep.subr.bf16.mxu0 %v2017
        %2720 = vmatpush1.bf16.msra.mxu0 %v2016
        %2721 = vmatprep.subr.bf16.mxu0 %v2019
        %2722 = vmatpush1.bf16.msra.mxu0 %v2018
        %2723 = vmatprep.subr.bf16.mxu0 %v2021
        %2724 = vmatpush1.bf16.msra.mxu0 %v2020
        %2725 = vmatprep.subr.bf16.mxu0 %v2023
        %2726 = vmatpush1.bf16.msra.mxu0 %v2022
        %2727 = vmatprep.subr.bf16.mxu0 %v2025
        %2728 = vmatpush1.bf16.msra.mxu0 %v2024
        %2729 = vmatprep.subr.bf16.mxu0 %v2027
        %2730 = vmatpush1.bf16.msra.mxu0 %v2026
        %2731 = vmatprep.subr.bf16.mxu0 %v2029
        %2732 = vmatpush1.bf16.msra.mxu0 %v2028
        %2733 = vmatprep.subr.bf16.mxu0 %v2031
        %2734 = vmatpush1.bf16.msra.mxu0 %v2030
        %2735 = vmatprep.mubr.bf16.mxu0 %v771
        %2736 = vmatmul.mubr.bf16.gmra.mrb[0].mxu0 %v769
        %v2737 = vpop.f32.mrb[0].mxu0
        %v2738 = vadd.f32 %v2697, %v2737
        %v2739 = vpop.f32.mrb[0].mxu0
        %v2740 = vadd.f32 %v2699, %v2739
        %v2741 = vpop.f32.mrb[0].mxu0
        %v2742 = vpop.f32.mrb[0].mxu0
        %2743 = vdwg.mxu0
        %2744 = vmatprep.subr.bf16.mxu0 %v2033
        %2745 = vmatpush1.bf16.msra.mxu0 %v2032
        %2746 = vmatprep.subr.bf16.mxu0 %v2035
        %2747 = vmatpush1.bf16.msra.mxu0 %v2034
        %2748 = vmatprep.subr.bf16.mxu0 %v2037
        %2749 = vmatpush1.bf16.msra.mxu0 %v2036
        %2750 = vmatprep.subr.bf16.mxu0 %v2039
        %2751 = vmatpush1.bf16.msra.mxu0 %v2038
        %2752 = vmatprep.subr.bf16.mxu0 %v2041
        %2753 = vmatpush1.bf16.msra.mxu0 %v2040
        %2754 = vmatprep.subr.bf16.mxu0 %v2043
        %2755 = vmatpush1.bf16.msra.mxu0 %v2042
        %2756 = vmatprep.subr.bf16.mxu0 %v2045
        %2757 = vmatpush1.bf16.msra.mxu0 %v2044
        %2758 = vmatprep.subr.bf16.mxu0 %v2047
        %2759 = vmatpush1.bf16.msra.mxu0 %v2046
        %2760 = vmatprep.subr.bf16.mxu0 %v2049
        %2761 = vmatpush1.bf16.msra.mxu0 %v2048
        %2762 = vmatprep.subr.bf16.mxu0 %v2051
        %2763 = vmatpush1.bf16.msra.mxu0 %v2050
        %2764 = vmatprep.subr.bf16.mxu0 %v2053
        %2765 = vmatpush1.bf16.msra.mxu0 %v2052
        %2766 = vmatprep.subr.bf16.mxu0 %v2055
        %2767 = vmatpush1.bf16.msra.mxu0 %v2054
        %2768 = vmatprep.subr.bf16.mxu0 %v2057
        %2769 = vmatpush1.bf16.msra.mxu0 %v2056
        %2770 = vmatprep.subr.bf16.mxu0 %v2059
        %2771 = vmatpush1.bf16.msra.mxu0 %v2058
        %2772 = vmatprep.subr.bf16.mxu0 %v2061
        %2773 = vmatpush1.bf16.msra.mxu0 %v2060
        %2774 = vmatprep.subr.bf16.mxu0 %v2063
        %2775 = vmatpush1.bf16.msra.mxu0 %v2062
        %2776 = vmatprep.mubr.bf16.mxu0 %v793
        %2777 = vmatmul.mubr.bf16.gmra.mrb[0].mxu0 %v786
        %v2778 = vpop.f32.mrb[0].mxu0
        %v2779 = vadd.f32 %v2738, %v2778
        %v2780 = vpop.f32.mrb[0].mxu0
        %v2781 = vadd.f32 %v2740, %v2780
        %v2782 = vpop.f32.mrb[0].mxu0
        %v2783 = vpop.f32.mrb[0].mxu0
        %2784 = vdwg.mxu0
        %2785 = vmatprep.subr.bf16.mxu0 %v2065
        %2786 = vmatpush1.bf16.msra.mxu0 %v2064
        %2787 = vmatprep.subr.bf16.mxu0 %v2067
        %2788 = vmatpush1.bf16.msra.mxu0 %v2066
        %2789 = vmatprep.subr.bf16.mxu0 %v2069
        %2790 = vmatpush1.bf16.msra.mxu0 %v2068
        %2791 = vmatprep.subr.bf16.mxu0 %v2071
        %2792 = vmatpush1.bf16.msra.mxu0 %v2070
        %2793 = vmatprep.subr.bf16.mxu0 %v2073
        %2794 = vmatpush1.bf16.msra.mxu0 %v2072
        %2795 = vmatprep.subr.bf16.mxu0 %v2075
        %2796 = vmatpush1.bf16.msra.mxu0 %v2074
        %2797 = vmatprep.subr.bf16.mxu0 %v2077
        %2798 = vmatpush1.bf16.msra.mxu0 %v2076
        %2799 = vmatprep.subr.bf16.mxu0 %v2079
        %2800 = vmatpush1.bf16.msra.mxu0 %v2078
        %2801 = vmatprep.subr.bf16.mxu0 %v2081
        %2802 = vmatpush1.bf16.msra.mxu0 %v2080
        %2803 = vmatprep.subr.bf16.mxu0 %v2083
        %2804 = vmatpush1.bf16.msra.mxu0 %v2082
        %2805 = vmatprep.subr.bf16.mxu0 %v2085
        %2806 = vmatpush1.bf16.msra.mxu0 %v2084
        %2807 = vmatprep.subr.bf16.mxu0 %v2087
        %2808 = vmatpush1.bf16.msra.mxu0 %v2086
        %2809 = vmatprep.subr.bf16.mxu0 %v2089
        %2810 = vmatpush1.bf16.msra.mxu0 %v2088
        %2811 = vmatprep.subr.bf16.mxu0 %v2091
        %2812 = vmatpush1.bf16.msra.mxu0 %v2090
        %2813 = vmatprep.subr.bf16.mxu0 %v2093
        %2814 = vmatpush1.bf16.msra.mxu0 %v2092
        %2815 = vmatprep.subr.bf16.mxu0 %v2095
        %2816 = vmatpush1.bf16.msra.mxu0 %v2094
        %2817 = vmatprep.mubr.bf16.mxu0 %v795
        %2818 = vmatmul.mubr.bf16.gmra.mrb[0].mxu0 %v794
        %v2819 = vpop.f32.mrb[0].mxu0
        %v2820 = vadd.f32 %v2779, %v2819
        %v2821 = vpop.f32.mrb[0].mxu0
        %v2822 = vadd.f32 %v2781, %v2821
        %v2823 = vpop.f32.mrb[0].mxu0
        %v2824 = vpop.f32.mrb[0].mxu0
        %2825 = vdwg.mxu0
        %v2828 = vcombine.low %v2820, %v2822
        %v2830 = vunpack.c.l.s4 1983009808
        %v2831 = vunpack.c.0.s8 %v2830
        %v2832 = vlaneseq
        %v2833 = vshrl.u32 %v2832, 7
        %v2834 = vsub.s32 %v2831, %v2833
        %v2835 = vrot.slane %v2828, %v2834
        %v2837 = vadd.f32 %v350, %v2835
        %2838 = vst [vmem:[#allocation2] sm:$0xf] %v2837
        %p2839 = scmp.eq.s32.totalorder %s25, 7
        // Predicated region
        $region73: #{xception_dnn_head.1} parent=47 // pred_check
          %p2840 = pneg %p2839
        $region74: #{xception_dnn_head.1} parent=47 // pred_check_branch
          %2842 = sbr.rel (%p2840) target = $region76
        $region75: #{xception_dnn_head.1} parent=47 // pred_region
          %v2843 = vld [vmem:[#allocation2] sm:$0xf]
          %v2844 = vld [vmem:[#allocation6] sm:$0x3]
          %v2846 = vlaneseq
          %v2847 = vshrl.u32 %v2846, 7
          %v2848 = vsub.s32 0, %v2847
          %v2849 = vrot.slane %v2844, %v2848
          %v2850 = vlaneseq
          %v2851 = vshrl.u32 %v2850, 7
          %v2852 = vsub.s32 1, %v2851
          %v2853 = vrot.slane %v2844, %v2852
          %v2854 = vcombine.low %v2849, %v2853
          %v2856 = vunpack.c.l.s4 1983009808
          %v2857 = vunpack.c.0.s8 %v2856
          %v2858 = vlaneseq
          %v2859 = vshrl.u32 %v2858, 7
          %v2860 = vsub.s32 %v2857, %v2859
          %v2861 = vrot.slane %v2854, %v2860
          %v2863 = vadd.f32 %v2843, %v2861
          %v2866 = vunpack.c.l.s4 1983009808
          %v2867 = vunpack.c.0.s8 %v2866
          %v2868 = vlaneseq
          %v2869 = vshrl.u32 %v2868, 7
          %v2870 = vsub.s32 %v2867, %v2869
          %v2871 = vrot.slane %v2863, %v2870
          %v2872 = vcombine.high %v2871, %v2871
          %vm2875 = vcmask 1041408
          %v2876 = vsel %vm2875, %v2871, 0.0
          %v2877 = vrot.slane %v2876, 4
          %v2878 = vadd.f32 %v2876, %v2877
          %v2879 = vrot.slane %v2878, 2
          %v2880 = vadd.f32 %v2878, %v2879
          %v2881 = vrot.slane %v2880, 1
          %v2882 = vadd.f32 %v2880, %v2881
          %v2883 = vsel %vm2875, %v2872, 0.0
          %v2884 = vrot.slane %v2883, 4
          %v2885 = vadd.f32 %v2883, %v2884
          %v2886 = vrot.slane %v2885, 2
          %v2887 = vadd.f32 %v2885, %v2886
          %v2888 = vrot.slane %v2887, 1
          %v2889 = vadd.f32 %v2887, %v2888
          %v2890 = vrcp.pop 2.0
          %v2891 = vmul.f32 %v2882, %v2890
          %v2892 = vmul.f32 %v2889, %v2890
          %v2895 = vcombine.low %v2891, %v2892
          %v2897 = vunpack.c.l.s4 1983009808
          %v2898 = vunpack.c.0.s8 %v2897
          %v2899 = vlaneseq
          %v2900 = vshrl.u32 %v2899, 7
          %v2901 = vsub.s32 %v2898, %v2900
          %v2902 = vrot.slane %v2895, %v2901
          %v2904 = vsub.f32 %v2863, %v2902
          %v2905 = vmul.f32 %v2904, %v2904
          %v2908 = vunpack.c.l.s4 1983009808
          %v2909 = vunpack.c.0.s8 %v2908
          %v2910 = vlaneseq
          %v2911 = vshrl.u32 %v2910, 7
          %v2912 = vsub.s32 %v2909, %v2911
          %v2913 = vrot.slane %v2905, %v2912
          %v2914 = vcombine.high %v2913, %v2913
          %v2917 = vsel %vm2875, %v2913, 0.0
          %v2918 = vrot.slane %v2917, 4
          %v2919 = vadd.f32 %v2917, %v2918
          %v2920 = vrot.slane %v2919, 2
          %v2921 = vadd.f32 %v2919, %v2920
          %v2922 = vrot.slane %v2921, 1
          %v2923 = vadd.f32 %v2921, %v2922
          %v2924 = vsel %vm2875, %v2914, 0.0
          %v2925 = vrot.slane %v2924, 4
          %v2926 = vadd.f32 %v2924, %v2925
          %v2927 = vrot.slane %v2926, 2
          %v2928 = vadd.f32 %v2926, %v2927
          %v2929 = vrot.slane %v2928, 1
          %v2930 = vadd.f32 %v2928, %v2929
          %v2931 = vmul.f32 %v2923, %v2890
          %v2932 = vmul.f32 %v2930, %v2890
          %v2933 = vadd.f32 %v2931, 1e-05
          %v2934 = vadd.f32 %v2932, 1e-05
          %v2935 = vrsqrt.pop %v2933
          %v2936 = vrsqrt.pop %v2934
          %v2939 = vcombine.low %v2935, %v2936
          %v2941 = vunpack.c.l.s4 1983009808
          %v2942 = vunpack.c.0.s8 %v2941
          %v2943 = vlaneseq
          %v2944 = vshrl.u32 %v2943, 7
          %v2945 = vsub.s32 %v2942, %v2944
          %v2946 = vrot.slane %v2939, %v2945
          %v2948 = vmul.f32 %v2904, %v2946
          %v2949 = vld [vmem:[#allocation8] sm:$0x3]
          %v2951 = vlaneseq
          %v2952 = vshrl.u32 %v2951, 7
          %v2953 = vsub.s32 0, %v2952
          %v2954 = vrot.slane %v2949, %v2953
          %v2955 = vlaneseq
          %v2956 = vshrl.u32 %v2955, 7
          %v2957 = vsub.s32 1, %v2956
          %v2958 = vrot.slane %v2949, %v2957
          %v2959 = vcombine.low %v2954, %v2958
          %v2961 = vunpack.c.l.s4 1983009808
          %v2962 = vunpack.c.0.s8 %v2961
          %v2963 = vlaneseq
          %v2964 = vshrl.u32 %v2963, 7
          %v2965 = vsub.s32 %v2962, %v2964
          %v2966 = vrot.slane %v2959, %v2965
          %v2968 = vmul.f32 %v2948, %v2966
          %v2969 = vld [vmem:[#allocation9] sm:$0x3]
          %v2971 = vlaneseq
          %v2972 = vshrl.u32 %v2971, 7
          %v2973 = vsub.s32 0, %v2972
          %v2974 = vrot.slane %v2969, %v2973
          %v2975 = vlaneseq
          %v2976 = vshrl.u32 %v2975, 7
          %v2977 = vsub.s32 1, %v2976
          %v2978 = vrot.slane %v2969, %v2977
          %v2979 = vcombine.low %v2974, %v2978
          %v2981 = vunpack.c.l.s4 1983009808
          %v2982 = vunpack.c.0.s8 %v2981
          %v2983 = vlaneseq
          %v2984 = vshrl.u32 %v2983, 7
          %v2985 = vsub.s32 %v2982, %v2984
          %v2986 = vrot.slane %v2979, %v2985
          %v2988 = vadd.f32 %v2968, %v2986
          %vm2989 = vcmp.gt.f32.partialorder %v2988, 0.0
          %v2990 = vmul.f32 %v2988, 0.01
          %v2991 = vsel %vm2989, %v2988, %v2990
          %v2992 = vld [vmem:[#allocation11] sm:$0x3]
          %v2994 = vlaneseq
          %v2995 = vshrl.u32 %v2994, 7
          %v2996 = vsub.s32 0, %v2995
          %v2997 = vrot.slane %v2992, %v2996
          %v2998 = vlaneseq
          %v2999 = vshrl.u32 %v2998, 7
          %v3000 = vsub.s32 1, %v2999
          %v3001 = vrot.slane %v2992, %v3000
          %v3002 = vcombine.low %v2997, %v3001
          %v3004 = vunpack.c.l.s4 1983009808
          %v3005 = vunpack.c.0.s8 %v3004
          %v3006 = vlaneseq
          %v3007 = vshrl.u32 %v3006, 7
          %v3008 = vsub.s32 %v3005, %v3007
          %v3009 = vrot.slane %v3002, %v3008
          %v3011 = vmul.f32 %v2991, %v3009
          %v3014 = vunpack.c.l.s4 1983009808
          %v3015 = vunpack.c.0.s8 %v3014
          %v3016 = vlaneseq
          %v3017 = vshrl.u32 %v3016, 7
          %v3018 = vsub.s32 %v3015, %v3017
          %v3019 = vrot.slane %v3011, %v3018
          %v3020 = vcombine.high %v3019, %v3019
          %v3023 = vsel %vm2875, %v3019, 0.0
          %v3024 = vsel %vm2875, %v3020, 0.0
          %v3025 = vadd.f32 %v3023, %v3024
          %3026 = vadd.xlane.f32.xlu0 %v3025
          %v3027 = vpop.xlane.xlu0 %3026
          %v3028 = vld [vmem:[#allocation3] sm:$0x1]
          %v3030 = vlaneseq
          %v3031 = vshrl.u32 %v3030, 7
          %v3032 = vsub.s32 0, %v3031
          %v3033 = vrot.slane %v3028, %v3032
          %v3035 = vadd.f32 %v3027, %v3033
          %vm3036 = vcmask 1024
          %3037 = vst.msk [vmem:[%s7] sm:$0x3] %vm3036, %v3035
        $region76: #{xception_dnn_head.1} parent=47 // pred_fallthru
          _
        // Predicated region
        $region77: #{xception_dnn_head.1} parent=47 // pred_check
          %p3038 = pneg %p190
        $region78: #{xception_dnn_head.1} parent=47 // pred_check_branch
          %3040 = sbr.rel (%p3038) target = $region80
        $region79: #{xception_dnn_head.1} parent=47 // pred_region
          _
        $region80: #{xception_dnn_head.1} parent=47 // pred_fallthru
          _
        // Predicated region
        $region81: #{xception_dnn_head.1} parent=47 // pred_check
          %p3041 = pneg %p190
        $region82: #{xception_dnn_head.1} parent=47 // pred_check_branch
          %3043 = sbr.rel (%p3041) target = $region84
        $region83: #{xception_dnn_head.1} parent=47 // pred_region
          _
        $region84: #{xception_dnn_head.1} parent=47 // pred_fallthru
          _
      $region48: #{xception_dnn_head.1} parent=5 // pred_fallthru
        _
      %p3044 = scmp.le.s32.totalorder 2, %s20
      // Predicated region
      $region85: #{xception_dnn_head.1} parent=5 // pred_check
        %p3045 = pneg %p3044
      $region86: #{xception_dnn_head.1} parent=5 // pred_check_branch
        %3047 = sbr.rel (%p3045) target = $region88
      $region87: #{xception_dnn_head.1} parent=5 // pred_region
        %s3048 = ssub.s32 %s20, 2
      $region88: #{xception_dnn_head.1} parent=5 // pred_fallthru
        _
    $region6: #{xception_dnn_head.1} parent=1 // loop_footer
      %s24 = sadd.s32 1, %s20
    $region7: #{xception_dnn_head.1} parent=1 // loop_footer_branch
      %19 = sbr.rel target = $region3
    $region8: #{xception_dnn_head.1} parent=1 // loop_exit
      _
    %3049 = vsyncpa [#allocation5], 1
    %s3050 = scalar_lea.sflag [#allocation5], 1
    %3051 = vsyncpa %s3050, 1
    %3052 = vsyncpa [#allocation7], 1
    %3053 = vsyncpa [#allocation10], 1

</llo_original>
